<compile_context>
chip_gen: v6e
topology: v6e:2x2x1
jax: 0.10.0
libtpu: 0.0.40
codegen_flags: <defaults>
</compile_context>

<pallas_src>
import functools
import math

import jax
import jax.numpy as jnp
import numpy as np
from jax.experimental import pallas as pl
from jax.experimental.pallas import tpu as pltpu


# --------------------------------------------------------------------------- utils
def _lane_roll(x, shift):
    """np.roll(x, shift, axis=-1) with a static shift (slice + concat).

    # TODO(synk): switch to pltpu.roll (XLU slot, near-free) once the hardware rotate
    # direction is verified against np.roll on the target jax version; the projection
    # matmuls dominate this kernel either way.
    """
    lanes = x.shape[-1]
    shift = shift % lanes
    if shift == 0:
        return x
    return jnp.concatenate([x[..., lanes - shift:], x[..., :lanes - shift]], axis=-1)


def _pick_t_tile(T, target):
    """Largest T tile <= target that divides T and satisfies the (8,*) sublane rule."""
    if T <= target:
        return T
    for cand in range(min(target, T), 7, -1):
        if T % cand == 0 and cand % 8 == 0:
            return cand
    return T


# --------------------------------------------- kernel A: rotary + fused QKV project
def _rope_qkv_kernel(q_ref, k_ref, v_ref, cos_ref, sina_ref, sinb_ref,
                     wq_ref, wk_ref, wv_ref, bq_ref, bk_ref, bv_ref,
                     qo_ref, ko_ref, vo_ref,
                     *, n_head, d_k, compute_dtype):
    C = n_head * d_k
    d_half = d_k // 2

    def load2d(ref):
        x = ref[...]
        # drops the leading size-1 batch dim on the batch-major (compat) input layout;
        # a no-op on the lane-dense (tT, C) fast-path layout.
        return x.reshape(x.shape[-2], x.shape[-1])

    cos = cos_ref[...]            # (tT, C) f32, cos tiled across heads
    sina = sina_ref[...]          # (tT, C)  -sin on the first half of each head, else 0
    sinb = sinb_ref[...]          # (tT, C)  +sin on the second half of each head, else 0

    def rope(x):                  # rotate-half with the sign folded into sina/sinb (f32)
        return (x * cos
                + _lane_roll(x, C - d_half) * sina     # pulls x[j + d_half]  (-x2 term)
                + _lane_roll(x, d_half) * sinb)        # pulls x[j - d_half]  (+x1 term)

    def project(x, w_ref, b_ref):
        y = jnp.dot(x.astype(compute_dtype), w_ref[...],
                    preferred_element_type=jnp.float32)
        return y + b_ref[...]                          # bias add kept in f32

    def store_heads(o_ref, y):
        # (tT, C) lane-dense result -> head-major (H, tT, d_k) so kernel B receives
        # fully aligned per-head blocks straight from its BlockSpec.
        for hh in range(n_head):
            o_ref[0, hh] = y[:, hh * d_k:(hh + 1) * d_k].astype(o_ref.dtype)

    store_heads(qo_ref, project(rope(load2d(q_ref)), wq_ref, bq_ref))
    store_heads(ko_ref, project(rope(load2d(k_ref)), wk_ref, bk_ref))
    store_heads(vo_ref, project(load2d(v_ref), wv_ref, bv_ref))   # no rope on values


# ------------------------------------ kernel B: per-(batch, head) attention core
def _attention_kernel(q_ref, k_ref, v_ref, *rest, n_head, has_mask, out_rank3,
                      compute_dtype):
    if has_mask:
        bias_ref, wo_ref, bo_ref, o_ref = rest
    else:
        wo_ref, bo_ref, o_ref = rest

    h_id = pl.program_id(1)
    T, d_k = q_ref.shape[-2], q_ref.shape[-1]
    C = n_head * d_k

    q = q_ref[0, 0]               # (T, d_k) in the storage/compute dtype
    k = k_ref[0, 0]
    v = v_ref[0, 0]

    # scores in f32; the 1/sqrt(d_k) scale is folded into Wq/bq on the host.
    s = jax.lax.dot_general(q, k, (((1,), (1,)), ((), ())),
                            preferred_element_type=jnp.float32)
    if has_mask:
        # Additive -1e9 bias + lower clamp: padded logits become exactly -1e8, matching
        # masked_fill(-inf) + clamp(min=-1e8) of the reference (also for fully-masked
        # rows).  exp(-1e8 - m) underflows to 0 in f32, so padded keys get zero weight.
        s = jnp.maximum(s + bias_ref[0], -1.0e8)

    # f32 softmax with deferred normalization (normalize the (T, d_k) context instead
    # of the (T, T) probabilities).  Dropout on the probabilities is eval-mode identity.
    # TODO(synk): for long sequences, tile the key axis with an online (flash-style)
    # softmax so the (T, T) tile never materializes (also adds a megacore-parallel axis).
    m = jnp.max(s, axis=-1, keepdims=True)
    p = jnp.exp(s - m)
    denom = jnp.sum(p, axis=-1, keepdims=True)
    ctx = jnp.dot(p.astype(compute_dtype), v, preferred_element_type=jnp.float32)
    inv = pl.reciprocal(denom, approx=True)            # EUP fast path ...
    inv = inv * (2.0 - denom * inv)                    # ... + one Newton step (f32 acc.)
    ctx = ctx * inv                                    # (T, d_k), not (T, T)

    # Fused output projection: this head's d_k rows of W_out; heads accumulate into the
    # resident output block (head axis is the innermost, "arbitrary" grid axis).
    part = jnp.dot(ctx.astype(compute_dtype), wo_ref[0],
                   preferred_element_type=jnp.float32)

    def _init():
        b0 = jnp.broadcast_to(bo_ref[...], (T, C)).astype(o_ref.dtype)
        if out_rank3:
            o_ref[0] = b0
        else:
            o_ref[...] = b0
    pl.when(h_id == 0)(_init)

    if out_rank3:
        o_ref[0] = o_ref[0] + part.astype(o_ref.dtype)
    else:
        o_ref[...] = o_ref[...] + part.astype(o_ref.dtype)


# ---------------------------------------------------------------------- forward
def rotary_mha_forward(query, key, value, params, n_head,
                       key_padding_mask=None, rotary_base=10000,
                       compute_dtype=jnp.bfloat16, t_tile=256,
                       vmem_limit_bytes=48 * 1024 * 1024):
    """Forward pass of RotaryPositionMultiHeadedAttention.

    query/key/value: (T, B, C) float32 (module layout).
    key_padding_mask: optional (B, T); NONZERO entries mark PADDED key positions
        (same convention as the torch masked_fill path - assert before shipping).
    compute_dtype: jnp.bfloat16 (default; 2-4x MXU throughput and half the weight /
        intermediate HBM traffic on v5e/v6e/v7x) or jnp.float32 for a reference-exact
        path.  Rope, mask, softmax and all accumulation stay in f32 either way.
    t_tile: target T tile of the projection kernel; 256-512 is a good target on
        v5e/v6e (128 MiB VMEM), keep <= 128-256 on v7x (64 MiB VMEM).
    Returns (out (T, B, C) float32, None), like the torch module (attn not returned).
    """
    T, B, C = query.shape
    h = n_head
    assert C % h == 0, "n_feat must be divisible by n_head"
    d_k = C // h
    assert d_k % 2 == 0, "rotary dims must be even"

    # Lane-dense layouts with C-wide lane blocks are only legal when C is a multiple of
    # the 128-lane register width (or B == 1); otherwise fall back to a batch-major
    # layout (one XLA transpose on the inputs and one on the output).
    lane_dense = (C % 128 == 0) or (B == 1)

    f32 = jnp.float32
    scale = 1.0 / math.sqrt(d_k)

    # ---- rotary tables (f32), tiled across heads, rotate-half sign folded into sin ----
    inv_freq = 1.0 / (rotary_base ** (jnp.arange(0, d_k, 2, dtype=f32) / d_k))
    freqs = jnp.einsum("i,j->ij", jnp.arange(T, dtype=f32), inv_freq)
    emb = jnp.concatenate([freqs, freqs], axis=-1)              # (T, d_k)
    cos = jnp.tile(jnp.cos(emb), (1, h))                        # (T, C)
    sin = jnp.tile(jnp.sin(emb), (1, h))                        # (T, C)
    lane = jnp.arange(C) % d_k
    lo = (lane < d_k // 2).astype(f32)[None, :]
    sin_a = -sin * lo                                           # first half of each head
    sin_b = sin * (1.0 - lo)                                    # second half of each head

    # ---- weights: cast to the MXU dtype on the host; 1/sqrt(d_k) folded into Wq/bq ----
    wq = (params["wq"] * scale).astype(compute_dtype)
    wk = params["wk"].astype(compute_dtype)
    wv = params["wv"].astype(compute_dtype)
    bq = (params["bq"] * scale).reshape(1, C).astype(f32)
    bk = params["bk"].reshape(1, C).astype(f32)
    bv = params["bv"].reshape(1, C).astype(f32)
    wo = params["wo"].reshape(h, d_k, C).astype(compute_dtype)  # head-major rows of W_out
    bo = params["bo"].reshape(1, C).astype(f32)

    tT = _pick_t_tile(T, t_tile)
    n_t = T // tT
    itemsize = jnp.dtype(compute_dtype).itemsize

    # ---------------- kernel A: rotary + fused Q/K/V projections ----------------
    kernel_a = functools.partial(_rope_qkv_kernel, n_head=h, d_k=d_k,
                                 compute_dtype=compute_dtype)
    table_spec = pl.BlockSpec((tT, C), lambda i, b: (i, 0))
    w_spec = pl.BlockSpec((C, C), lambda i, b: (0, 0))
    bias_spec = pl.BlockSpec((1, C), lambda i, b: (0, 0))
    # TODO(synk): mark the resident weight/bias specs pipeline_mode=pl.Buffered(1) once
    # verified on the target jax version (saves the double-buffer copy of the weights).
    if lane_dense:
        xq, xk, xv = (t.reshape(T, B * C) for t in (query, key, value))
        x_spec = pl.BlockSpec((tT, C), lambda i, b: (i, b))          # lane block = batch b
    else:
        xq, xk, xv = (t.transpose(1, 0, 2) for t in (query, key, value))
        x_spec = pl.BlockSpec((1, tT, C), lambda i, b: (b, i, 0))

    cost_a = pl.CostEstimate(
        flops=int(6 * T * B * C * C + 12 * T * B * C),
        transcendentals=0,
        bytes_accessed=int(4 * (3 * T * B * C + 3 * T * C + 3 * C)
                           + itemsize * (3 * C * C + 3 * T * B * C)))

    q_p, k_p, v_p = pl.pallas_call(
        kernel_a,
        out_shape=[jax.ShapeDtypeStruct((B, h, T, d_k), compute_dtype)] * 3,
        grid=(n_t, B),
        in_specs=[x_spec, x_spec, x_spec,
                  table_spec, table_spec, table_spec,
                  w_spec, w_spec, w_spec,
                  bias_spec, bias_spec, bias_spec],
        out_specs=[pl.BlockSpec((1, h, tT, d_k), lambda i, b: (b, 0, i, 0))] * 3,
        compiler_params=pltpu.CompilerParams(
            dimension_semantics=("parallel", "parallel"),
            vmem_limit_bytes=vmem_limit_bytes),
        cost_estimate=cost_a,
    )(xq, xk, xv, cos, sin_a, sin_b, wq, wk, wv, bq, bk, bv)

    # -------- kernel B: attention core + fused, head-accumulated output projection ------
    has_mask = key_padding_mask is not None
    kernel_b = functools.partial(_attention_kernel, n_head=h, has_mask=has_mask,
                                 out_rank3=not lane_dense, compute_dtype=compute_dtype)

    qkv_spec = pl.BlockSpec((1, 1, T, d_k), lambda b, hh: (b, hh, 0, 0))
    wo_spec = pl.BlockSpec((1, d_k, C), lambda b, hh: (hh, 0, 0))
    bo_spec = pl.BlockSpec((1, C), lambda b, hh: (0, 0))

    in_specs_b = [qkv_spec, qkv_spec, qkv_spec]
    args_b = [q_p, k_p, v_p]
    if has_mask:
        neg_bias = jnp.where(key_padding_mask != 0, -1.0e9, 0.0).astype(f32)
        args_b.append(neg_bias.reshape(B, 1, T))
        in_specs_b.append(pl.BlockSpec((1, 1, T), lambda b, hh: (b, 0, 0)))
    in_specs_b += [wo_spec, bo_spec]
    args_b += [wo, bo]

    if lane_dense:
        out_shape_b = jax.ShapeDtypeStruct((T, B * C), f32)
        out_spec_b = pl.BlockSpec((T, C), lambda b, hh: (0, b))      # lane-dense, transpose-free
    else:
        out_shape_b = jax.ShapeDtypeStruct((B, T, C), f32)
        out_spec_b = pl.BlockSpec((1, T, C), lambda b, hh: (b, 0, 0))

    cost_b = pl.CostEstimate(
        flops=int(4 * B * T * T * C + 2 * B * T * C * C + 8 * B * h * T * T),
        transcendentals=int(B * h * T * T),
        bytes_accessed=int(itemsize * (3 * B * T * C + C * C)
                           + 4 * (B * T * C + B * T + C)))

    out = pl.pallas_call(
        kernel_b,
        out_shape=out_shape_b,
        grid=(B, h),
        in_specs=in_specs_b,
        out_specs=out_spec_b,
        compiler_params=pltpu.CompilerParams(
            dimension_semantics=("parallel", "arbitrary"),
            vmem_limit_bytes=vmem_limit_bytes),
        cost_estimate=cost_b,
    )(*args_b)

    if lane_dense:
        return out.reshape(T, B, C), None          # free reshape, no XLA transpose
    return out.transpose(1, 0, 2), None


# ---------------------------- pure-JAX reference (module semantics, f32) -----------
def _reference(query, key, value, params, n_head, key_padding_mask=None,
               rotary_base=10000):
    T, B, C = query.shape
    h, d_k = n_head, C // n_head
    inv_freq = 1.0 / (rotary_base ** (jnp.arange(0, d_k, 2, dtype=jnp.float32) / d_k))
    freqs = jnp.einsum("i,j->ij", jnp.arange(T, dtype=jnp.float32), inv_freq)
    emb = jnp.concatenate([freqs, freqs], axis=-1)
    cos = jnp.cos(emb)[:, None, None, :]
    sin = jnp.sin(emb)[:, None, None, :]

    def rot_half(x):
        x1, x2 = x[..., : d_k // 2], x[..., d_k // 2:]
        return jnp.concatenate([-x2, x1], axis=-1)

    q4 = query.reshape(T, B, h, d_k)
    k4 = key.reshape(T, B, h, d_k)
    q4 = q4 * cos + rot_half(q4) * sin
    k4 = k4 * cos + rot_half(k4) * sin
    q = q4.reshape(T, B, C).transpose(1, 0, 2)
    k = k4.reshape(T, B, C).transpose(1, 0, 2)
    v = value.transpose(1, 0, 2)

    q = (q @ params["wq"] + params["bq"]).reshape(B, T, h, d_k).transpose(0, 2, 1, 3)
    k = (k @ params["wk"] + params["bk"]).reshape(B, T, h, d_k).transpose(0, 2, 1, 3)
    v = (v @ params["wv"] + params["bv"]).reshape(B, T, h, d_k).transpose(0, 2, 1, 3)

    scores = jnp.einsum("bhqd,bhkd->bhqk", q, k) / math.sqrt(d_k)
    if key_padding_mask is not None:
        pad = (key_padding_mask != 0)[:, None, None, :]
        scores = jnp.where(pad, -jnp.inf, scores)
    scores = jnp.clip(scores, -1.0e8, 1.0e8)
    attn = jax.nn.softmax(scores, axis=-1)
    x = jnp.einsum("bhqk,bhkd->bhqd", attn, v)
    x = x.transpose(0, 2, 1, 3).reshape(B, T, C)
    out = x @ params["wo"] + params["bo"]
    return out.transpose(1, 0, 2)


def _make_params(rng, C):
    keys = jax.random.split(rng, 8)
    wscale = 1.0 / math.sqrt(C)
    return {
        "wq": jax.random.normal(keys[0], (C, C), jnp.float32) * wscale,
        "bq": jax.random.normal(keys[1], (C,), jnp.float32) * 0.1,
        "wk": jax.random.normal(keys[2], (C, C), jnp.float32) * wscale,
        "bk": jax.random.normal(keys[3], (C,), jnp.float32) * 0.1,
        "wv": jax.random.normal(keys[4], (C, C), jnp.float32) * wscale,
        "bv": jax.random.normal(keys[5], (C,), jnp.float32) * 0.1,
        "wo": jax.random.normal(keys[6], (C, C), jnp.float32) * wscale,
        "bo": jax.random.normal(keys[7], (C,), jnp.float32) * 0.1,
    }


# ---------------------------------------- main -------------------------------------
if __name__ == "__main__":
    root = jax.random.PRNGKey(0)
    k_par, k_q, k_k, k_v, k_par2, k_q2, k_k2, k_v2 = jax.random.split(root, 8)

    # ---- test 1: lane-aligned production-style path (C % 128 == 0), bf16 compute ----
    T, B, C, H = 16, 2, 128, 4           # d_k = 32
    params = _make_params(k_par, C)
    query = jax.random.normal(k_q, (T, B, C), jnp.float32)
    key_ = jax.random.normal(k_k, (T, B, C), jnp.float32)
    value = jax.random.normal(k_v, (T, B, C), jnp.float32)

    out, _ = rotary_mha_forward(query, key_, value, params, n_head=H, t_tile=8)
    out = jax.block_until_ready(out)
    assert out.shape == (T, B, C)
    ref = _reference(query, key_, value, params, n_head=H)
    # bf16 MXU operands (f32 accumulation/softmax) -> looser tolerance vs f32 reference.
    np.testing.assert_allclose(np.asarray(out), np.asarray(ref), rtol=5e-2, atol=5e-2)

    kpm = jnp.zeros((B, T), jnp.int32).at[1, T - 3:].set(1)   # pad last 3 keys of batch 1
    out_m, _ = rotary_mha_forward(query, key_, value, params, n_head=H, t_tile=8,
                                  key_padding_mask=kpm)
    out_m = jax.block_until_ready(out_m)
    ref_m = _reference(query, key_, value, params, n_head=H, key_padding_mask=kpm)
    np.testing.assert_allclose(np.asarray(out_m), np.asarray(ref_m), rtol=5e-2, atol=5e-2)

    # ---- test 2: small unaligned shapes (batch-major fallback), f32 compute, tight ----
    T2, B2, C2, H2 = 8, 2, 32, 4          # d_k = 8
    params2 = _make_params(k_par2, C2)
    query2 = jax.random.normal(k_q2, (T2, B2, C2), jnp.float32)
    key2 = jax.random.normal(k_k2, (T2, B2, C2), jnp.float32)
    value2 = jax.random.normal(k_v2, (T2, B2, C2), jnp.float32)
    kpm2 = jnp.zeros((B2, T2), jnp.int32).at[0, T2 - 2:].set(1)

    out2, _ = rotary_mha_forward(query2, key2, value2, params2, n_head=H2,
                                 key_padding_mask=kpm2, compute_dtype=jnp.float32)
    out2 = jax.block_until_ready(out2)
    ref2 = _reference(query2, key2, value2, params2, n_head=H2, key_padding_mask=kpm2)
    np.testing.assert_allclose(np.asarray(out2), np.asarray(ref2), rtol=1e-3, atol=1e-3)

    print("KERNEL_OK")
</pallas_src>

<mosaic_0001>
module attributes {stable_mosaic.version = 11 : i64} {
  func.func @_rope_qkv_kernel(%arg0: i32, %arg1: i32, %arg2: memref<8x128xf32, #tpu.memory_space<vmem>>, %arg3: memref<8x128xf32, #tpu.memory_space<vmem>>, %arg4: memref<8x128xf32, #tpu.memory_space<vmem>>, %arg5: memref<8x128xf32, #tpu.memory_space<vmem>>, %arg6: memref<8x128xf32, #tpu.memory_space<vmem>>, %arg7: memref<8x128xf32, #tpu.memory_space<vmem>>, %arg8: memref<128x128xbf16, #tpu.memory_space<vmem>>, %arg9: memref<128x128xbf16, #tpu.memory_space<vmem>>, %arg10: memref<128x128xbf16, #tpu.memory_space<vmem>>, %arg11: memref<1x128xf32, #tpu.memory_space<vmem>>, %arg12: memref<1x128xf32, #tpu.memory_space<vmem>>, %arg13: memref<1x128xf32, #tpu.memory_space<vmem>>, %arg14: memref<1x4x8x32xbf16, #tpu.memory_space<vmem>>, %arg15: memref<1x4x8x32xbf16, #tpu.memory_space<vmem>>, %arg16: memref<1x4x8x32xbf16, #tpu.memory_space<vmem>>) attributes {dimension_semantics = [#tpu.dimension_semantics<parallel>, #tpu.dimension_semantics<parallel>], iteration_bounds = array<i64: 2, 2>, scalar_prefetch = 0 : i64, scratch_operands = 0 : i64, tpu.core_type = #tpu.core_type<tc>, window_params = [{transform_indices = @transform_0, window_bounds = array<i64: 8, 128>}, {transform_indices = @transform_1, window_bounds = array<i64: 8, 128>}, {transform_indices = @transform_2, window_bounds = array<i64: 8, 128>}, {transform_indices = @transform_3, window_bounds = array<i64: 8, 128>}, {transform_indices = @transform_4, window_bounds = array<i64: 8, 128>}, {transform_indices = @transform_5, window_bounds = array<i64: 8, 128>}, {pipeline_mode = #tpu.pipeline_mode<synchronous>, transform_indices = @transform_6, window_bounds = array<i64: 128, 128>}, {pipeline_mode = #tpu.pipeline_mode<synchronous>, transform_indices = @transform_7, window_bounds = array<i64: 128, 128>}, {pipeline_mode = #tpu.pipeline_mode<synchronous>, transform_indices = @transform_8, window_bounds = array<i64: 128, 128>}, {pipeline_mode = #tpu.pipeline_mode<synchronous>, transform_indices = @transform_9, window_bounds = array<i64: 1, 128>}, {pipeline_mode = #tpu.pipeline_mode<synchronous>, transform_indices = @transform_10, window_bounds = array<i64: 1, 128>}, {pipeline_mode = #tpu.pipeline_mode<synchronous>, transform_indices = @transform_11, window_bounds = array<i64: 1, 128>}, {transform_indices = @transform_12, window_bounds = array<i64: 1, 4, 8, 32>}, {transform_indices = @transform_13, window_bounds = array<i64: 1, 4, 8, 32>}, {transform_indices = @transform_14, window_bounds = array<i64: 1, 4, 8, 32>}]} {
    %c0 = arith.constant 0 : index
    %c0_0 = arith.constant 0 : index
    %0 = vector.load %arg5[%c0, %c0_0] : memref<8x128xf32, #tpu.memory_space<vmem>>, vector<8x128xf32>
    %c0_1 = arith.constant 0 : index
    %c0_2 = arith.constant 0 : index
    %1 = vector.load %arg6[%c0_1, %c0_2] : memref<8x128xf32, #tpu.memory_space<vmem>>, vector<8x128xf32>
    %c0_3 = arith.constant 0 : index
    %c0_4 = arith.constant 0 : index
    %2 = vector.load %arg7[%c0_3, %c0_4] : memref<8x128xf32, #tpu.memory_space<vmem>>, vector<8x128xf32>
    %c0_5 = arith.constant 0 : index
    %c0_6 = arith.constant 0 : index
    %3 = vector.load %arg2[%c0_5, %c0_6] : memref<8x128xf32, #tpu.memory_space<vmem>>, vector<8x128xf32>
    %4 = arith.mulf %3, %0 : vector<8x128xf32>
    %5 = vector.extract_strided_slice %3 {offsets = [0, 16], sizes = [8, 112], strides = [1, 1]} : vector<8x128xf32> to vector<8x112xf32>
    %6 = vector.extract_strided_slice %3 {offsets = [0, 0], sizes = [8, 16], strides = [1, 1]} : vector<8x128xf32> to vector<8x16xf32>
    %7 = tpu.concatenate %5, %6 in 1 : vector<8x112xf32>, vector<8x16xf32> -> vector<8x128xf32>
    %8 = arith.mulf %7, %1 : vector<8x128xf32>
    %9 = arith.addf %4, %8 : vector<8x128xf32>
    %10 = vector.extract_strided_slice %3 {offsets = [0, 112], sizes = [8, 16], strides = [1, 1]} : vector<8x128xf32> to vector<8x16xf32>
    %11 = vector.extract_strided_slice %3 {offsets = [0, 0], sizes = [8, 112], strides = [1, 1]} : vector<8x128xf32> to vector<8x112xf32>
    %12 = tpu.concatenate %10, %11 in 1 : vector<8x16xf32>, vector<8x112xf32> -> vector<8x128xf32>
    %13 = arith.mulf %12, %2 : vector<8x128xf32>
    %14 = arith.addf %9, %13 : vector<8x128xf32>
    %15 = arith.truncf %14 : vector<8x128xf32> to vector<8x128xbf16>
    %c0_7 = arith.constant 0 : index
    %c0_8 = arith.constant 0 : index
    %16 = vector.load %arg8[%c0_7, %c0_8] : memref<128x128xbf16, #tpu.memory_space<vmem>>, vector<128x128xbf16>
    %cst = arith.constant dense<0.000000e+00> : vector<8x128xf32>
    %17 = tpu.matmul %15, %16, %cst {dimension_numbers = #tpu.dot_dimension_numbers<[1], [0], [0], [1], [0, 0, 1, 1], [], []>} : vector<8x128xbf16>, vector<128x128xbf16>, vector<8x128xf32> -> vector<8x128xf32>
    %c0_9 = arith.constant 0 : index
    %c0_10 = arith.constant 0 : index
    %18 = vector.load %arg11[%c0_9, %c0_10] : memref<1x128xf32, #tpu.memory_space<vmem>>, vector<1x128xf32>
    %19 = vector.broadcast %18 : vector<1x128xf32> to vector<8x128xf32>
    %20 = arith.addf %17, %19 : vector<8x128xf32>
    %21 = vector.extract_strided_slice %20 {offsets = [0, 0], sizes = [8, 32], strides = [1, 1]} : vector<8x128xf32> to vector<8x32xf32>
    %22 = arith.truncf %21 : vector<8x32xf32> to vector<8x32xbf16>
    %c0_11 = arith.constant 0 : index
    %c0_12 = arith.constant 0 : index
    %c0_13 = arith.constant 0 : index
    %c0_14 = arith.constant 0 : index
    %23 = vector.load %arg14[%c0_11, %c0_12, %c0_13, %c0_14] : memref<1x4x8x32xbf16, #tpu.memory_space<vmem>>, vector<1x1x8x32xbf16>
    %24 = vector.shape_cast %23 : vector<1x1x8x32xbf16> to vector<8x32xbf16>
    %25 = vector.shape_cast %22 : vector<8x32xbf16> to vector<1x1x8x32xbf16>
    tpu.vector_store %arg14[%c0_11, %c0_12, %c0_13, %c0_14], %25 {strides = array<i32>} : memref<1x4x8x32xbf16, #tpu.memory_space<vmem>>, vector<1x1x8x32xbf16>,
    %26 = vector.extract_strided_slice %20 {offsets = [0, 32], sizes = [8, 32], strides = [1, 1]} : vector<8x128xf32> to vector<8x32xf32>
    %27 = arith.truncf %26 : vector<8x32xf32> to vector<8x32xbf16>
    %c0_15 = arith.constant 0 : index
    %c1 = arith.constant 1 : index
    %c0_16 = arith.constant 0 : index
    %c0_17 = arith.constant 0 : index
    %28 = vector.load %arg14[%c0_15, %c1, %c0_16, %c0_17] : memref<1x4x8x32xbf16, #tpu.memory_space<vmem>>, vector<1x1x8x32xbf16>
    %29 = vector.shape_cast %28 : vector<1x1x8x32xbf16> to vector<8x32xbf16>
    %30 = vector.shape_cast %27 : vector<8x32xbf16> to vector<1x1x8x32xbf16>
    tpu.vector_store %arg14[%c0_15, %c1, %c0_16, %c0_17], %30 {strides = array<i32>} : memref<1x4x8x32xbf16, #tpu.memory_space<vmem>>, vector<1x1x8x32xbf16>,
    %31 = vector.extract_strided_slice %20 {offsets = [0, 64], sizes = [8, 32], strides = [1, 1]} : vector<8x128xf32> to vector<8x32xf32>
    %32 = arith.truncf %31 : vector<8x32xf32> to vector<8x32xbf16>
    %c0_18 = arith.constant 0 : index
    %c2 = arith.constant 2 : index
    %c0_19 = arith.constant 0 : index
    %c0_20 = arith.constant 0 : index
    %33 = vector.load %arg14[%c0_18, %c2, %c0_19, %c0_20] : memref<1x4x8x32xbf16, #tpu.memory_space<vmem>>, vector<1x1x8x32xbf16>
    %34 = vector.shape_cast %33 : vector<1x1x8x32xbf16> to vector<8x32xbf16>
    %35 = vector.shape_cast %32 : vector<8x32xbf16> to vector<1x1x8x32xbf16>
    tpu.vector_store %arg14[%c0_18, %c2, %c0_19, %c0_20], %35 {strides = array<i32>} : memref<1x4x8x32xbf16, #tpu.memory_space<vmem>>, vector<1x1x8x32xbf16>,
    %36 = vector.extract_strided_slice %20 {offsets = [0, 96], sizes = [8, 32], strides = [1, 1]} : vector<8x128xf32> to vector<8x32xf32>
    %37 = arith.truncf %36 : vector<8x32xf32> to vector<8x32xbf16>
    %c0_21 = arith.constant 0 : index
    %c3 = arith.constant 3 : index
    %c0_22 = arith.constant 0 : index
    %c0_23 = arith.constant 0 : index
    %38 = vector.load %arg14[%c0_21, %c3, %c0_22, %c0_23] : memref<1x4x8x32xbf16, #tpu.memory_space<vmem>>, vector<1x1x8x32xbf16>
    %39 = vector.shape_cast %38 : vector<1x1x8x32xbf16> to vector<8x32xbf16>
    %40 = vector.shape_cast %37 : vector<8x32xbf16> to vector<1x1x8x32xbf16>
    tpu.vector_store %arg14[%c0_21, %c3, %c0_22, %c0_23], %40 {strides = array<i32>} : memref<1x4x8x32xbf16, #tpu.memory_space<vmem>>, vector<1x1x8x32xbf16>,
    %c0_24 = arith.constant 0 : index
    %c0_25 = arith.constant 0 : index
    %41 = vector.load %arg3[%c0_24, %c0_25] : memref<8x128xf32, #tpu.memory_space<vmem>>, vector<8x128xf32>
    %42 = arith.mulf %41, %0 : vector<8x128xf32>
    %43 = vector.extract_strided_slice %41 {offsets = [0, 16], sizes = [8, 112], strides = [1, 1]} : vector<8x128xf32> to vector<8x112xf32>
    %44 = vector.extract_strided_slice %41 {offsets = [0, 0], sizes = [8, 16], strides = [1, 1]} : vector<8x128xf32> to vector<8x16xf32>
    %45 = tpu.concatenate %43, %44 in 1 : vector<8x112xf32>, vector<8x16xf32> -> vector<8x128xf32>
    %46 = arith.mulf %45, %1 : vector<8x128xf32>
    %47 = arith.addf %42, %46 : vector<8x128xf32>
    %48 = vector.extract_strided_slice %41 {offsets = [0, 112], sizes = [8, 16], strides = [1, 1]} : vector<8x128xf32> to vector<8x16xf32>
    %49 = vector.extract_strided_slice %41 {offsets = [0, 0], sizes = [8, 112], strides = [1, 1]} : vector<8x128xf32> to vector<8x112xf32>
    %50 = tpu.concatenate %48, %49 in 1 : vector<8x16xf32>, vector<8x112xf32> -> vector<8x128xf32>
    %51 = arith.mulf %50, %2 : vector<8x128xf32>
    %52 = arith.addf %47, %51 : vector<8x128xf32>
    %53 = arith.truncf %52 : vector<8x128xf32> to vector<8x128xbf16>
    %c0_26 = arith.constant 0 : index
    %c0_27 = arith.constant 0 : index
    %54 = vector.load %arg9[%c0_26, %c0_27] : memref<128x128xbf16, #tpu.memory_space<vmem>>, vector<128x128xbf16>
    %cst_28 = arith.constant dense<0.000000e+00> : vector<8x128xf32>
    %55 = tpu.matmul %53, %54, %cst_28 {dimension_numbers = #tpu.dot_dimension_numbers<[1], [0], [0], [1], [0, 0, 1, 1], [], []>} : vector<8x128xbf16>, vector<128x128xbf16>, vector<8x128xf32> -> vector<8x128xf32>
    %c0_29 = arith.constant 0 : index
    %c0_30 = arith.constant 0 : index
    %56 = vector.load %arg12[%c0_29, %c0_30] : memref<1x128xf32, #tpu.memory_space<vmem>>, vector<1x128xf32>
    %57 = vector.broadcast %56 : vector<1x128xf32> to vector<8x128xf32>
    %58 = arith.addf %55, %57 : vector<8x128xf32>
    %59 = vector.extract_strided_slice %58 {offsets = [0, 0], sizes = [8, 32], strides = [1, 1]} : vector<8x128xf32> to vector<8x32xf32>
    %60 = arith.truncf %59 : vector<8x32xf32> to vector<8x32xbf16>
    %c0_31 = arith.constant 0 : index
    %c0_32 = arith.constant 0 : index
    %c0_33 = arith.constant 0 : index
    %c0_34 = arith.constant 0 : index
    %61 = vector.load %arg15[%c0_31, %c0_32, %c0_33, %c0_34] : memref<1x4x8x32xbf16, #tpu.memory_space<vmem>>, vector<1x1x8x32xbf16>
    %62 = vector.shape_cast %61 : vector<1x1x8x32xbf16> to vector<8x32xbf16>
    %63 = vector.shape_cast %60 : vector<8x32xbf16> to vector<1x1x8x32xbf16>
    tpu.vector_store %arg15[%c0_31, %c0_32, %c0_33, %c0_34], %63 {strides = array<i32>} : memref<1x4x8x32xbf16, #tpu.memory_space<vmem>>, vector<1x1x8x32xbf16>,
    %64 = vector.extract_strided_slice %58 {offsets = [0, 32], sizes = [8, 32], strides = [1, 1]} : vector<8x128xf32> to vector<8x32xf32>
    %65 = arith.truncf %64 : vector<8x32xf32> to vector<8x32xbf16>
    %c0_35 = arith.constant 0 : index
    %c1_36 = arith.constant 1 : index
    %c0_37 = arith.constant 0 : index
    %c0_38 = arith.constant 0 : index
    %66 = vector.load %arg15[%c0_35, %c1_36, %c0_37, %c0_38] : memref<1x4x8x32xbf16, #tpu.memory_space<vmem>>, vector<1x1x8x32xbf16>
    %67 = vector.shape_cast %66 : vector<1x1x8x32xbf16> to vector<8x32xbf16>
    %68 = vector.shape_cast %65 : vector<8x32xbf16> to vector<1x1x8x32xbf16>
    tpu.vector_store %arg15[%c0_35, %c1_36, %c0_37, %c0_38], %68 {strides = array<i32>} : memref<1x4x8x32xbf16, #tpu.memory_space<vmem>>, vector<1x1x8x32xbf16>,
    %69 = vector.extract_strided_slice %58 {offsets = [0, 64], sizes = [8, 32], strides = [1, 1]} : vector<8x128xf32> to vector<8x32xf32>
    %70 = arith.truncf %69 : vector<8x32xf32> to vector<8x32xbf16>
    %c0_39 = arith.constant 0 : index
    %c2_40 = arith.constant 2 : index
    %c0_41 = arith.constant 0 : index
    %c0_42 = arith.constant 0 : index
    %71 = vector.load %arg15[%c0_39, %c2_40, %c0_41, %c0_42] : memref<1x4x8x32xbf16, #tpu.memory_space<vmem>>, vector<1x1x8x32xbf16>
    %72 = vector.shape_cast %71 : vector<1x1x8x32xbf16> to vector<8x32xbf16>
    %73 = vector.shape_cast %70 : vector<8x32xbf16> to vector<1x1x8x32xbf16>
    tpu.vector_store %arg15[%c0_39, %c2_40, %c0_41, %c0_42], %73 {strides = array<i32>} : memref<1x4x8x32xbf16, #tpu.memory_space<vmem>>, vector<1x1x8x32xbf16>,
    %74 = vector.extract_strided_slice %58 {offsets = [0, 96], sizes = [8, 32], strides = [1, 1]} : vector<8x128xf32> to vector<8x32xf32>
    %75 = arith.truncf %74 : vector<8x32xf32> to vector<8x32xbf16>
    %c0_43 = arith.constant 0 : index
    %c3_44 = arith.constant 3 : index
    %c0_45 = arith.constant 0 : index
    %c0_46 = arith.constant 0 : index
    %76 = vector.load %arg15[%c0_43, %c3_44, %c0_45, %c0_46] : memref<1x4x8x32xbf16, #tpu.memory_space<vmem>>, vector<1x1x8x32xbf16>
    %77 = vector.shape_cast %76 : vector<1x1x8x32xbf16> to vector<8x32xbf16>
    %78 = vector.shape_cast %75 : vector<8x32xbf16> to vector<1x1x8x32xbf16>
    tpu.vector_store %arg15[%c0_43, %c3_44, %c0_45, %c0_46], %78 {strides = array<i32>} : memref<1x4x8x32xbf16, #tpu.memory_space<vmem>>, vector<1x1x8x32xbf16>,
    %c0_47 = arith.constant 0 : index
    %c0_48 = arith.constant 0 : index
    %79 = vector.load %arg4[%c0_47, %c0_48] : memref<8x128xf32, #tpu.memory_space<vmem>>, vector<8x128xf32>
    %80 = arith.truncf %79 : vector<8x128xf32> to vector<8x128xbf16>
    %c0_49 = arith.constant 0 : index
    %c0_50 = arith.constant 0 : index
    %81 = vector.load %arg10[%c0_49, %c0_50] : memref<128x128xbf16, #tpu.memory_space<vmem>>, vector<128x128xbf16>
    %cst_51 = arith.constant dense<0.000000e+00> : vector<8x128xf32>
    %82 = tpu.matmul %80, %81, %cst_51 {dimension_numbers = #tpu.dot_dimension_numbers<[1], [0], [0], [1], [0, 0, 1, 1], [], []>} : vector<8x128xbf16>, vector<128x128xbf16>, vector<8x128xf32> -> vector<8x128xf32>
    %c0_52 = arith.constant 0 : index
    %c0_53 = arith.constant 0 : index
    %83 = vector.load %arg13[%c0_52, %c0_53] : memref<1x128xf32, #tpu.memory_space<vmem>>, vector<1x128xf32>
    %84 = vector.broadcast %83 : vector<1x128xf32> to vector<8x128xf32>
    %85 = arith.addf %82, %84 : vector<8x128xf32>
    %86 = vector.extract_strided_slice %85 {offsets = [0, 0], sizes = [8, 32], strides = [1, 1]} : vector<8x128xf32> to vector<8x32xf32>
    %87 = arith.truncf %86 : vector<8x32xf32> to vector<8x32xbf16>
    %c0_54 = arith.constant 0 : index
    %c0_55 = arith.constant 0 : index
    %c0_56 = arith.constant 0 : index
    %c0_57 = arith.constant 0 : index
    %88 = vector.load %arg16[%c0_54, %c0_55, %c0_56, %c0_57] : memref<1x4x8x32xbf16, #tpu.memory_space<vmem>>, vector<1x1x8x32xbf16>
    %89 = vector.shape_cast %88 : vector<1x1x8x32xbf16> to vector<8x32xbf16>
    %90 = vector.shape_cast %87 : vector<8x32xbf16> to vector<1x1x8x32xbf16>
    tpu.vector_store %arg16[%c0_54, %c0_55, %c0_56, %c0_57], %90 {strides = array<i32>} : memref<1x4x8x32xbf16, #tpu.memory_space<vmem>>, vector<1x1x8x32xbf16>,
    %91 = vector.extract_strided_slice %85 {offsets = [0, 32], sizes = [8, 32], strides = [1, 1]} : vector<8x128xf32> to vector<8x32xf32>
    %92 = arith.truncf %91 : vector<8x32xf32> to vector<8x32xbf16>
    %c0_58 = arith.constant 0 : index
    %c1_59 = arith.constant 1 : index
    %c0_60 = arith.constant 0 : index
    %c0_61 = arith.constant 0 : index
    %93 = vector.load %arg16[%c0_58, %c1_59, %c0_60, %c0_61] : memref<1x4x8x32xbf16, #tpu.memory_space<vmem>>, vector<1x1x8x32xbf16>
    %94 = vector.shape_cast %93 : vector<1x1x8x32xbf16> to vector<8x32xbf16>
    %95 = vector.shape_cast %92 : vector<8x32xbf16> to vector<1x1x8x32xbf16>
    tpu.vector_store %arg16[%c0_58, %c1_59, %c0_60, %c0_61], %95 {strides = array<i32>} : memref<1x4x8x32xbf16, #tpu.memory_space<vmem>>, vector<1x1x8x32xbf16>,
    %96 = vector.extract_strided_slice %85 {offsets = [0, 64], sizes = [8, 32], strides = [1, 1]} : vector<8x128xf32> to vector<8x32xf32>
    %97 = arith.truncf %96 : vector<8x32xf32> to vector<8x32xbf16>
    %c0_62 = arith.constant 0 : index
    %c2_63 = arith.constant 2 : index
    %c0_64 = arith.constant 0 : index
    %c0_65 = arith.constant 0 : index
    %98 = vector.load %arg16[%c0_62, %c2_63, %c0_64, %c0_65] : memref<1x4x8x32xbf16, #tpu.memory_space<vmem>>, vector<1x1x8x32xbf16>
    %99 = vector.shape_cast %98 : vector<1x1x8x32xbf16> to vector<8x32xbf16>
    %100 = vector.shape_cast %97 : vector<8x32xbf16> to vector<1x1x8x32xbf16>
    tpu.vector_store %arg16[%c0_62, %c2_63, %c0_64, %c0_65], %100 {strides = array<i32>} : memref<1x4x8x32xbf16, #tpu.memory_space<vmem>>, vector<1x1x8x32xbf16>,
    %101 = vector.extract_strided_slice %85 {offsets = [0, 96], sizes = [8, 32], strides = [1, 1]} : vector<8x128xf32> to vector<8x32xf32>
    %102 = arith.truncf %101 : vector<8x32xf32> to vector<8x32xbf16>
    %c0_66 = arith.constant 0 : index
    %c3_67 = arith.constant 3 : index
    %c0_68 = arith.constant 0 : index
    %c0_69 = arith.constant 0 : index
    %103 = vector.load %arg16[%c0_66, %c3_67, %c0_68, %c0_69] : memref<1x4x8x32xbf16, #tpu.memory_space<vmem>>, vector<1x1x8x32xbf16>
    %104 = vector.shape_cast %103 : vector<1x1x8x32xbf16> to vector<8x32xbf16>
    %105 = vector.shape_cast %102 : vector<8x32xbf16> to vector<1x1x8x32xbf16>
    tpu.vector_store %arg16[%c0_66, %c3_67, %c0_68, %c0_69], %105 {strides = array<i32>} : memref<1x4x8x32xbf16, #tpu.memory_space<vmem>>, vector<1x1x8x32xbf16>,
    return
  }
  func.func @transform_0(%arg0: i32, %arg1: i32) -> (i32, i32) {
    %c0_i32 = arith.constant 0 : i32
    return %arg0, %arg1 : i32, i32
  }
  func.func @transform_1(%arg0: i32, %arg1: i32) -> (i32, i32) {
    %c0_i32 = arith.constant 0 : i32
    return %arg0, %arg1 : i32, i32
  }
  func.func @transform_2(%arg0: i32, %arg1: i32) -> (i32, i32) {
    %c0_i32 = arith.constant 0 : i32
    return %arg0, %arg1 : i32, i32
  }
  func.func @transform_3(%arg0: i32, %arg1: i32) -> (i32, i32) {
    %c0_i32 = arith.constant 0 : i32
    %c0_i32_0 = arith.constant 0 : i32
    return %arg0, %c0_i32 : i32, i32
  }
  func.func @transform_4(%arg0: i32, %arg1: i32) -> (i32, i32) {
    %c0_i32 = arith.constant 0 : i32
    %c0_i32_0 = arith.constant 0 : i32
    return %arg0, %c0_i32 : i32, i32
  }
  func.func @transform_5(%arg0: i32, %arg1: i32) -> (i32, i32) {
    %c0_i32 = arith.constant 0 : i32
    %c0_i32_0 = arith.constant 0 : i32
    return %arg0, %c0_i32 : i32, i32
  }
  func.func @transform_6(%arg0: i32, %arg1: i32) -> (i32, i32) {
    %c0_i32 = arith.constant 0 : i32
    %c0_i32_0 = arith.constant 0 : i32
    %c0_i32_1 = arith.constant 0 : i32
    return %c0_i32, %c0_i32_0 : i32, i32
  }
  func.func @transform_7(%arg0: i32, %arg1: i32) -> (i32, i32) {
    %c0_i32 = arith.constant 0 : i32
    %c0_i32_0 = arith.constant 0 : i32
    %c0_i32_1 = arith.constant 0 : i32
    return %c0_i32, %c0_i32_0 : i32, i32
  }
  func.func @transform_8(%arg0: i32, %arg1: i32) -> (i32, i32) {
    %c0_i32 = arith.constant 0 : i32
    %c0_i32_0 = arith.constant 0 : i32
    %c0_i32_1 = arith.constant 0 : i32
    return %c0_i32, %c0_i32_0 : i32, i32
  }
  func.func @transform_9(%arg0: i32, %arg1: i32) -> (i32, i32) {
    %c0_i32 = arith.constant 0 : i32
    %c0_i32_0 = arith.constant 0 : i32
    %c0_i32_1 = arith.constant 0 : i32
    return %c0_i32, %c0_i32_0 : i32, i32
  }
  func.func @transform_10(%arg0: i32, %arg1: i32) -> (i32, i32) {
    %c0_i32 = arith.constant 0 : i32
    %c0_i32_0 = arith.constant 0 : i32
    %c0_i32_1 = arith.constant 0 : i32
    return %c0_i32, %c0_i32_0 : i32, i32
  }
  func.func @transform_11(%arg0: i32, %arg1: i32) -> (i32, i32) {
    %c0_i32 = arith.constant 0 : i32
    %c0_i32_0 = arith.constant 0 : i32
    %c0_i32_1 = arith.constant 0 : i32
    return %c0_i32, %c0_i32_0 : i32, i32
  }
  func.func @transform_12(%arg0: i32, %arg1: i32) -> (i32, i32, i32, i32) {
    %c0_i32 = arith.constant 0 : i32
    %c0_i32_0 = arith.constant 0 : i32
    %c0_i32_1 = arith.constant 0 : i32
    return %arg1, %c0_i32, %arg0, %c0_i32_0 : i32, i32, i32, i32
  }
  func.func @transform_13(%arg0: i32, %arg1: i32) -> (i32, i32, i32, i32) {
    %c0_i32 = arith.constant 0 : i32
    %c0_i32_0 = arith.constant 0 : i32
    %c0_i32_1 = arith.constant 0 : i32
    return %arg1, %c0_i32, %arg0, %c0_i32_0 : i32, i32, i32, i32
  }
  func.func @transform_14(%arg0: i32, %arg1: i32) -> (i32, i32, i32, i32) {
    %c0_i32 = arith.constant 0 : i32
    %c0_i32_0 = arith.constant 0 : i32
    %c0_i32_1 = arith.constant 0 : i32
    return %arg1, %c0_i32, %arg0, %c0_i32_0 : i32, i32, i32, i32
  }
}

</mosaic_0001>

<llo_original>
// kernel: tpu_custom_call.1
$region0: #{tpu_custom_call.1}
  #allocation0 [shape = 'u32[]', space=smem, size = 0x4, offset = 0x4, fixed_abs, tag = 'smem constant byte address 0x4 - core index']
  #allocation1 [shape = 'u32[144,128]{1,0:T(1,128)}', space=vmem, size = 0x12000, scoped, tag = 'internal scratch']
  %s0 = inlined_call_operand.hbm [shape: f32[16,256], index: 0, kind: input, shape index: {}]
  %s1 = inlined_call_operand.hbm [shape: f32[16,256], index: 1, kind: input, shape index: {}]
  %s2 = inlined_call_operand.hbm [shape: f32[16,256], index: 2, kind: input, shape index: {}]
  %s3 = inlined_call_operand.hbm [shape: f32[16,128], index: 3, kind: input, shape index: {}]
  %s4 = inlined_call_operand.hbm [shape: f32[16,128], index: 4, kind: input, shape index: {}]
  %s5 = inlined_call_operand.hbm [shape: f32[16,128], index: 5, kind: input, shape index: {}]
  %s6 = inlined_call_operand.hbm [shape: bf16[128,128], index: 6, kind: input, shape index: {}]
  %s7 = inlined_call_operand.hbm [shape: bf16[128,128], index: 7, kind: input, shape index: {}]
  %s8 = inlined_call_operand.hbm [shape: bf16[128,128], index: 8, kind: input, shape index: {}]
  %s9 = inlined_call_operand.vmem [shape: f32[1,128], index: 9, kind: input, shape index: {}]
  %s10 = inlined_call_operand.vmem [shape: f32[1,128], index: 10, kind: input, shape index: {}]
  %s11 = inlined_call_operand.vmem [shape: f32[1,128], index: 11, kind: input, shape index: {}]
  %s12 = inlined_call_operand.hbm [shape: bf16[2,4,16,32], index: 12, kind: output, shape index: {0}]
  %s13 = inlined_call_operand.hbm [shape: bf16[2,4,16,32], index: 13, kind: output, shape index: {1}]
  %s14 = inlined_call_operand.hbm [shape: bf16[2,4,16,32], index: 14, kind: output, shape index: {2}]
  %15 = xla_tuple %s12, %s13, %s14
  %s16 = sld [smem:[#allocation0]]
  $region133: #{tpu_custom_call.1} parent=0
    _
  %s18 = ssub.s32 1, %s16
  %s19 = scalar_select 0, %s18, %s16
  $region1: #{tpu_custom_call.1} parent=0
    #allocation2 [shape = 'u8[8192]{0}', space=vmem, size = 0x2000, scoped, tag = 'input window, operand 0']
    #allocation3 [shape = 's32[2]{0}', space=sflag, size = 0x8, scoped, tag = 'scoped memory for tpu_custom_call.1']
    #allocation4 [shape = 's32[2]{0}', space=sflag, size = 0x8, scoped, tag = 'scoped memory for tpu_custom_call.1']
    #allocation5 [shape = 'u8[8192]{0}', space=vmem, size = 0x2000, scoped, tag = 'input window, operand 1']
    #allocation6 [shape = 's32[2]{0}', space=sflag, size = 0x8, scoped, tag = 'scoped memory for tpu_custom_call.1']
    #allocation7 [shape = 'u8[8192]{0}', space=vmem, size = 0x2000, scoped, tag = 'input window, operand 2']
    #allocation8 [shape = 'u8[8192]{0}', space=vmem, size = 0x2000, scoped, tag = 'input window, operand 3']
    #allocation9 [shape = 's32[2]{0}', space=sflag, size = 0x8, scoped, tag = 'scoped memory for tpu_custom_call.1']
    #allocation10 [shape = 'u8[8192]{0}', space=vmem, size = 0x2000, scoped, tag = 'input window, operand 4']
    #allocation11 [shape = 'u8[8192]{0}', space=vmem, size = 0x2000, scoped, tag = 'input window, operand 5']
    #allocation12 [shape = 's32[2]{0}', space=sflag, size = 0x8, scoped, tag = 'scoped memory for tpu_custom_call.1']
    #allocation13 [shape = 'u8[32768]{0}', space=vmem, size = 0x8000, scoped, tag = 'input window, operand 6, single buffered']
    #allocation14 [shape = 'u8[32768]{0}', space=vmem, size = 0x8000, scoped, tag = 'input window, operand 7, single buffered']
    #allocation15 [shape = 's32[1]{0}', space=sflag, size = 0x4, scoped, tag = 'scoped memory for tpu_custom_call.1']
    #allocation16 [shape = 'u8[32768]{0}', space=vmem, size = 0x8000, scoped, tag = 'input window, operand 8, single buffered']
    #allocation17 [shape = 'u8[16384]{0}', space=vmem, size = 0x4000, scoped, tag = 'output window, operand 0']
    #allocation18 [shape = 'u8[16384]{0}', space=vmem, size = 0x4000, scoped, tag = 'output window, operand 1']
    #allocation19 [shape = 's32[2]{0}', space=sflag, size = 0x8, scoped, tag = 'scoped memory for tpu_custom_call.1']
    #allocation20 [shape = 'u8[16384]{0}', space=vmem, size = 0x4000, scoped, tag = 'output window, operand 2']
    %20 = vsyncpa [#allocation3], 0
    %s21 = scalar_lea.sflag [#allocation3], 1
    %22 = vsyncpa %s21, 0
    %23 = vsyncpa [#allocation6], 0
    %s24 = scalar_lea.sflag [#allocation6], 1
    %25 = vsyncpa %s24, 0
    %26 = vsyncpa [#allocation9], 0
    %s27 = scalar_lea.sflag [#allocation9], 1
    %28 = vsyncpa %s27, 0
    %29 = vsyncpa [#allocation12], 0
    %s30 = scalar_lea.sflag [#allocation12], 1
    %31 = vsyncpa %s30, 0
    %32 = vsyncpa [#allocation15], 0
    %33 = vsyncpa [#allocation4], 0
    %s34 = scalar_lea.sflag [#allocation4], 1
    %35 = vsyncpa %s34, 0
    %36 = vsyncpa [#allocation19], 0
    %s37 = scalar_lea.sflag [#allocation19], 1
    %38 = vsyncpa %s37, 0
    loop: start=0, step=1, limit=6
    $region2: #{tpu_custom_call.1} parent=1 // loop_pre_header
      _
    $region3: #{tpu_custom_call.1} parent=1 // loop_header
      %s40 = sphi 0, %s44
      %p41 = scmp.ge.s32.totalorder %s40, 6
      %s47 = sphi 0, %s59
      %s48 = sphi 0, %s55
      %s49 = sphi 0, %s47
      %s50 = sphi 0, %s48
      %s51 = sphi 0, %s49
      %s52 = sphi 0, %s50
      %s64 = sphi 0, %s66
      %s67 = sphi 0, %s64
      %s68 = sphi 0, %s67
      %s84 = sphi 0, %s68
      %s92 = sphi 0, %s94
      %s95 = sphi 0, %s92
      %s96 = sphi 0, %s95
      %s112 = sphi 0, %s96
      %s120 = sphi 0, %s122
      %s123 = sphi 0, %s120
      %s124 = sphi 0, %s123
      %s140 = sphi 0, %s124
      %s146 = sphi 0, %s148
      %s149 = sphi 0, %s146
      %s150 = sphi 0, %s149
      %s166 = sphi 0, %s150
      %s172 = sphi 0, %s174
      %s175 = sphi 0, %s172
      %s176 = sphi 0, %s175
      %s192 = sphi 0, %s176
      %s198 = sphi 0, %s200
      %s201 = sphi 0, %s198
      %s202 = sphi 0, %s201
      %s218 = sphi 0, %s202
      %s222 = sphi 0, %s222
      %s224 = sphi 0, %s222
      %s225 = sphi 0, %s224
      %s239 = sphi 0, %s225
      %s243 = sphi 0, %s243
      %s245 = sphi 0, %s243
      %s246 = sphi 0, %s245
      %s260 = sphi 0, %s246
      %s264 = sphi 0, %s264
      %s266 = sphi 0, %s264
      %s267 = sphi 0, %s266
      %s281 = sphi 0, %s267
      %s285 = sphi 0, %s285
      %s287 = sphi 0, %s285
      %s288 = sphi 0, %s287
      %s302 = sphi 0, %s288
      %s306 = sphi 0, %s306
      %s308 = sphi 0, %s306
      %s309 = sphi 0, %s308
      %s323 = sphi 0, %s309
      %s327 = sphi 0, %s327
      %s329 = sphi 0, %s327
      %s330 = sphi 0, %s329
      %s344 = sphi 0, %s330
      %s352 = sphi 0, %s354
      %s355 = sphi 0, %s352
      %s356 = sphi 0, %s355
      %s372 = sphi 0, %s356
      %s380 = sphi 0, %s382
      %s383 = sphi 0, %s380
      %s384 = sphi 0, %s383
      %s400 = sphi 0, %s384
      %s408 = sphi 0, %s410
      %s411 = sphi 0, %s408
      %s412 = sphi 0, %s411
      %s428 = sphi 0, %s412
    $region4: #{tpu_custom_call.1} parent=1 // loop_header_branch
      %43 = sbr.rel (%p41) target = $region8
    $region5: #{tpu_custom_call.1} parent=1 // loop_body
      %s45 = ssub.s32 %s40, 1
      %s46 = ssub.s32 %s40, 2
      %s53 = sadd.s32 1, %s48
      %p54 = scmp.ge.s32.totalorder %s53, 2
      %s55 = scalar_select %p54, 0, %s53
      %s56 = sadd.s32 1, %s47
      %s57 = scalar_select %p54, %s56, %s47
      %p58 = scmp.ge.s32.totalorder %s57, 2
      %s59 = scalar_select %p58, 0, %s57
      %s60 = ssub.s32 %s47, %s59
      %s61 = ssub.s32 %s48, %s55
      %s62 = sor.u32 %s60, %s61
      %p63 = scmp.eq.s32.totalorder %s62, 0
      %s65 = sadd.s32 %s64, 1
      %s66 = scalar_select %p63, %s64, %s65
      %p69 = pneg %p63
      %p70 = scmp.eq.s32.totalorder %s40, 3
      %p71 = por %p69, %p70
      %p72 = scmp.ne.s32.totalorder %s64, %s67
      %p73 = scmp.eq.s32.totalorder %s40, 0
      %p74 = por %p72, %p73
      %p75 = scmp.ne.s32.totalorder %s64, %s67
      %p76 = scmp.eq.s32.totalorder %s45, 3
      %p77 = por %p75, %p76
      %p78 = scmp.ne.s32.totalorder %s67, %s68
      %p79 = scmp.eq.s32.totalorder %s45, 0
      %p80 = por %p78, %p79
      %p81 = scmp.ne.s32.totalorder %s67, %s68
      %p82 = scmp.eq.s32.totalorder %s46, 3
      %p83 = por %p81, %p82
      %p85 = scmp.ne.s32.totalorder %s68, %s84
      %p86 = scmp.eq.s32.totalorder %s46, 0
      %p87 = por %p85, %p86
      %s88 = ssub.s32 %s47, %s59
      %s89 = ssub.s32 %s48, %s55
      %s90 = sor.u32 %s88, %s89
      %p91 = scmp.eq.s32.totalorder %s90, 0
      %s93 = sadd.s32 %s92, 1
      %s94 = scalar_select %p91, %s92, %s93
      %p97 = pneg %p91
      %p98 = scmp.eq.s32.totalorder %s40, 3
      %p99 = por %p97, %p98
      %p100 = scmp.ne.s32.totalorder %s92, %s95
      %p101 = scmp.eq.s32.totalorder %s40, 0
      %p102 = por %p100, %p101
      %p103 = scmp.ne.s32.totalorder %s92, %s95
      %p104 = scmp.eq.s32.totalorder %s45, 3
      %p105 = por %p103, %p104
      %p106 = scmp.ne.s32.totalorder %s95, %s96
      %p107 = scmp.eq.s32.totalorder %s45, 0
      %p108 = por %p106, %p107
      %p109 = scmp.ne.s32.totalorder %s95, %s96
      %p110 = scmp.eq.s32.totalorder %s46, 3
      %p111 = por %p109, %p110
      %p113 = scmp.ne.s32.totalorder %s96, %s112
      %p114 = scmp.eq.s32.totalorder %s46, 0
      %p115 = por %p113, %p114
      %s116 = ssub.s32 %s47, %s59
      %s117 = ssub.s32 %s48, %s55
      %s118 = sor.u32 %s116, %s117
      %p119 = scmp.eq.s32.totalorder %s118, 0
      %s121 = sadd.s32 %s120, 1
      %s122 = scalar_select %p119, %s120, %s121
      %p125 = pneg %p119
      %p126 = scmp.eq.s32.totalorder %s40, 3
      %p127 = por %p125, %p126
      %p128 = scmp.ne.s32.totalorder %s120, %s123
      %p129 = scmp.eq.s32.totalorder %s40, 0
      %p130 = por %p128, %p129
      %p131 = scmp.ne.s32.totalorder %s120, %s123
      %p132 = scmp.eq.s32.totalorder %s45, 3
      %p133 = por %p131, %p132
      %p134 = scmp.ne.s32.totalorder %s123, %s124
      %p135 = scmp.eq.s32.totalorder %s45, 0
      %p136 = por %p134, %p135
      %p137 = scmp.ne.s32.totalorder %s123, %s124
      %p138 = scmp.eq.s32.totalorder %s46, 3
      %p139 = por %p137, %p138
      %p141 = scmp.ne.s32.totalorder %s124, %s140
      %p142 = scmp.eq.s32.totalorder %s46, 0
      %p143 = por %p141, %p142
      %s144 = ssub.s32 %s47, %s59
      %p145 = scmp.eq.s32.totalorder %s144, 0
      %s147 = sadd.s32 %s146, 1
      %s148 = scalar_select %p145, %s146, %s147
      %p151 = pneg %p145
      %p152 = scmp.eq.s32.totalorder %s40, 3
      %p153 = por %p151, %p152
      %p154 = scmp.ne.s32.totalorder %s146, %s149
      %p155 = scmp.eq.s32.totalorder %s40, 0
      %p156 = por %p154, %p155
      %p157 = scmp.ne.s32.totalorder %s146, %s149
      %p158 = scmp.eq.s32.totalorder %s45, 3
      %p159 = por %p157, %p158
      %p160 = scmp.ne.s32.totalorder %s149, %s150
      %p161 = scmp.eq.s32.totalorder %s45, 0
      %p162 = por %p160, %p161
      %p163 = scmp.ne.s32.totalorder %s149, %s150
      %p164 = scmp.eq.s32.totalorder %s46, 3
      %p165 = por %p163, %p164
      %p167 = scmp.ne.s32.totalorder %s150, %s166
      %p168 = scmp.eq.s32.totalorder %s46, 0
      %p169 = por %p167, %p168
      %s170 = ssub.s32 %s47, %s59
      %p171 = scmp.eq.s32.totalorder %s170, 0
      %s173 = sadd.s32 %s172, 1
      %s174 = scalar_select %p171, %s172, %s173
      %p177 = pneg %p171
      %p178 = scmp.eq.s32.totalorder %s40, 3
      %p179 = por %p177, %p178
      %p180 = scmp.ne.s32.totalorder %s172, %s175
      %p181 = scmp.eq.s32.totalorder %s40, 0
      %p182 = por %p180, %p181
      %p183 = scmp.ne.s32.totalorder %s172, %s175
      %p184 = scmp.eq.s32.totalorder %s45, 3
      %p185 = por %p183, %p184
      %p186 = scmp.ne.s32.totalorder %s175, %s176
      %p187 = scmp.eq.s32.totalorder %s45, 0
      %p188 = por %p186, %p187
      %p189 = scmp.ne.s32.totalorder %s175, %s176
      %p190 = scmp.eq.s32.totalorder %s46, 3
      %p191 = por %p189, %p190
      %p193 = scmp.ne.s32.totalorder %s176, %s192
      %p194 = scmp.eq.s32.totalorder %s46, 0
      %p195 = por %p193, %p194
      %s196 = ssub.s32 %s47, %s59
      %p197 = scmp.eq.s32.totalorder %s196, 0
      %s199 = sadd.s32 %s198, 1
      %s200 = scalar_select %p197, %s198, %s199
      %p203 = pneg %p197
      %p204 = scmp.eq.s32.totalorder %s40, 3
      %p205 = por %p203, %p204
      %p206 = scmp.ne.s32.totalorder %s198, %s201
      %p207 = scmp.eq.s32.totalorder %s40, 0
      %p208 = por %p206, %p207
      %p209 = scmp.ne.s32.totalorder %s198, %s201
      %p210 = scmp.eq.s32.totalorder %s45, 3
      %p211 = por %p209, %p210
      %p212 = scmp.ne.s32.totalorder %s201, %s202
      %p213 = scmp.eq.s32.totalorder %s45, 0
      %p214 = por %p212, %p213
      %p215 = scmp.ne.s32.totalorder %s201, %s202
      %p216 = scmp.eq.s32.totalorder %s46, 3
      %p217 = por %p215, %p216
      %p219 = scmp.ne.s32.totalorder %s202, %s218
      %p220 = scmp.eq.s32.totalorder %s46, 0
      %p221 = por %p219, %p220
      %s223 = sadd.s32 %s222, 1
      %p226 = scmp.eq.s32.totalorder %s40, 3
      %p227 = scmp.ne.s32.totalorder %s222, %s224
      %p228 = scmp.eq.s32.totalorder %s40, 0
      %p229 = por %p227, %p228
      %p230 = scmp.ne.s32.totalorder %s222, %s224
      %p231 = scmp.eq.s32.totalorder %s45, 3
      %p232 = por %p230, %p231
      %p233 = scmp.ne.s32.totalorder %s224, %s225
      %p234 = scmp.eq.s32.totalorder %s45, 0
      %p235 = por %p233, %p234
      %p236 = scmp.ne.s32.totalorder %s224, %s225
      %p237 = scmp.eq.s32.totalorder %s46, 3
      %p238 = por %p236, %p237
      %p240 = scmp.ne.s32.totalorder %s225, %s239
      %p241 = scmp.eq.s32.totalorder %s46, 0
      %p242 = por %p240, %p241
      %s244 = sadd.s32 %s243, 1
      %p247 = scmp.eq.s32.totalorder %s40, 3
      %p248 = scmp.ne.s32.totalorder %s243, %s245
      %p249 = scmp.eq.s32.totalorder %s40, 0
      %p250 = por %p248, %p249
      %p251 = scmp.ne.s32.totalorder %s243, %s245
      %p252 = scmp.eq.s32.totalorder %s45, 3
      %p253 = por %p251, %p252
      %p254 = scmp.ne.s32.totalorder %s245, %s246
      %p255 = scmp.eq.s32.totalorder %s45, 0
      %p256 = por %p254, %p255
      %p257 = scmp.ne.s32.totalorder %s245, %s246
      %p258 = scmp.eq.s32.totalorder %s46, 3
      %p259 = por %p257, %p258
      %p261 = scmp.ne.s32.totalorder %s246, %s260
      %p262 = scmp.eq.s32.totalorder %s46, 0
      %p263 = por %p261, %p262
      %s265 = sadd.s32 %s264, 1
      %p268 = scmp.eq.s32.totalorder %s40, 3
      %p269 = scmp.ne.s32.totalorder %s264, %s266
      %p270 = scmp.eq.s32.totalorder %s40, 0
      %p271 = por %p269, %p270
      %p272 = scmp.ne.s32.totalorder %s264, %s266
      %p273 = scmp.eq.s32.totalorder %s45, 3
      %p274 = por %p272, %p273
      %p275 = scmp.ne.s32.totalorder %s266, %s267
      %p276 = scmp.eq.s32.totalorder %s45, 0
      %p277 = por %p275, %p276
      %p278 = scmp.ne.s32.totalorder %s266, %s267
      %p279 = scmp.eq.s32.totalorder %s46, 3
      %p280 = por %p278, %p279
      %p282 = scmp.ne.s32.totalorder %s267, %s281
      %p283 = scmp.eq.s32.totalorder %s46, 0
      %p284 = por %p282, %p283
      %s286 = sadd.s32 %s285, 1
      %p289 = scmp.eq.s32.totalorder %s40, 3
      %p290 = scmp.ne.s32.totalorder %s285, %s287
      %p291 = scmp.eq.s32.totalorder %s40, 0
      %p292 = por %p290, %p291
      %p293 = scmp.ne.s32.totalorder %s285, %s287
      %p294 = scmp.eq.s32.totalorder %s45, 3
      %p295 = por %p293, %p294
      %p296 = scmp.ne.s32.totalorder %s287, %s288
      %p297 = scmp.eq.s32.totalorder %s45, 0
      %p298 = por %p296, %p297
      %p299 = scmp.ne.s32.totalorder %s287, %s288
      %p300 = scmp.eq.s32.totalorder %s46, 3
      %p301 = por %p299, %p300
      %p303 = scmp.ne.s32.totalorder %s288, %s302
      %p304 = scmp.eq.s32.totalorder %s46, 0
      %p305 = por %p303, %p304
      %s307 = sadd.s32 %s306, 1
      %p310 = scmp.eq.s32.totalorder %s40, 3
      %p311 = scmp.ne.s32.totalorder %s306, %s308
      %p312 = scmp.eq.s32.totalorder %s40, 0
      %p313 = por %p311, %p312
      %p314 = scmp.ne.s32.totalorder %s306, %s308
      %p315 = scmp.eq.s32.totalorder %s45, 3
      %p316 = por %p314, %p315
      %p317 = scmp.ne.s32.totalorder %s308, %s309
      %p318 = scmp.eq.s32.totalorder %s45, 0
      %p319 = por %p317, %p318
      %p320 = scmp.ne.s32.totalorder %s308, %s309
      %p321 = scmp.eq.s32.totalorder %s46, 3
      %p322 = por %p320, %p321
      %p324 = scmp.ne.s32.totalorder %s309, %s323
      %p325 = scmp.eq.s32.totalorder %s46, 0
      %p326 = por %p324, %p325
      %s328 = sadd.s32 %s327, 1
      %p331 = scmp.eq.s32.totalorder %s40, 3
      %p332 = scmp.ne.s32.totalorder %s327, %s329
      %p333 = scmp.eq.s32.totalorder %s40, 0
      %p334 = por %p332, %p333
      %p335 = scmp.ne.s32.totalorder %s327, %s329
      %p336 = scmp.eq.s32.totalorder %s45, 3
      %p337 = por %p335, %p336
      %p338 = scmp.ne.s32.totalorder %s329, %s330
      %p339 = scmp.eq.s32.totalorder %s45, 0
      %p340 = por %p338, %p339
      %p341 = scmp.ne.s32.totalorder %s329, %s330
      %p342 = scmp.eq.s32.totalorder %s46, 3
      %p343 = por %p341, %p342
      %p345 = scmp.ne.s32.totalorder %s330, %s344
      %p346 = scmp.eq.s32.totalorder %s46, 0
      %p347 = por %p345, %p346
      %s348 = ssub.s32 %s48, %s55
      %s349 = ssub.s32 %s47, %s59
      %s350 = sor.u32 %s348, %s349
      %p351 = scmp.eq.s32.totalorder %s350, 0
      %s353 = sadd.s32 %s352, 1
      %s354 = scalar_select %p351, %s352, %s353
      %p357 = pneg %p351
      %p358 = scmp.eq.s32.totalorder %s40, 3
      %p359 = por %p357, %p358
      %p360 = scmp.ne.s32.totalorder %s352, %s355
      %p361 = scmp.eq.s32.totalorder %s40, 0
      %p362 = por %p360, %p361
      %p363 = scmp.ne.s32.totalorder %s352, %s355
      %p364 = scmp.eq.s32.totalorder %s45, 3
      %p365 = por %p363, %p364
      %p366 = scmp.ne.s32.totalorder %s355, %s356
      %p367 = scmp.eq.s32.totalorder %s45, 0
      %p368 = por %p366, %p367
      %p369 = scmp.ne.s32.totalorder %s355, %s356
      %p370 = scmp.eq.s32.totalorder %s46, 3
      %p371 = por %p369, %p370
      %p373 = scmp.ne.s32.totalorder %s356, %s372
      %p374 = scmp.eq.s32.totalorder %s46, 0
      %p375 = por %p373, %p374
      %s376 = ssub.s32 %s48, %s55
      %s377 = ssub.s32 %s47, %s59
      %s378 = sor.u32 %s376, %s377
      %p379 = scmp.eq.s32.totalorder %s378, 0
      %s381 = sadd.s32 %s380, 1
      %s382 = scalar_select %p379, %s380, %s381
      %p385 = pneg %p379
      %p386 = scmp.eq.s32.totalorder %s40, 3
      %p387 = por %p385, %p386
      %p388 = scmp.ne.s32.totalorder %s380, %s383
      %p389 = scmp.eq.s32.totalorder %s40, 0
      %p390 = por %p388, %p389
      %p391 = scmp.ne.s32.totalorder %s380, %s383
      %p392 = scmp.eq.s32.totalorder %s45, 3
      %p393 = por %p391, %p392
      %p394 = scmp.ne.s32.totalorder %s383, %s384
      %p395 = scmp.eq.s32.totalorder %s45, 0
      %p396 = por %p394, %p395
      %p397 = scmp.ne.s32.totalorder %s383, %s384
      %p398 = scmp.eq.s32.totalorder %s46, 3
      %p399 = por %p397, %p398
      %p401 = scmp.ne.s32.totalorder %s384, %s400
      %p402 = scmp.eq.s32.totalorder %s46, 0
      %p403 = por %p401, %p402
      %s404 = ssub.s32 %s48, %s55
      %s405 = ssub.s32 %s47, %s59
      %s406 = sor.u32 %s404, %s405
      %p407 = scmp.eq.s32.totalorder %s406, 0
      %s409 = sadd.s32 %s408, 1
      %s410 = scalar_select %p407, %s408, %s409
      %p413 = pneg %p407
      %p414 = scmp.eq.s32.totalorder %s40, 3
      %p415 = por %p413, %p414
      %p416 = scmp.ne.s32.totalorder %s408, %s411
      %p417 = scmp.eq.s32.totalorder %s40, 0
      %p418 = por %p416, %p417
      %p419 = scmp.ne.s32.totalorder %s408, %s411
      %p420 = scmp.eq.s32.totalorder %s45, 3
      %p421 = por %p419, %p420
      %p422 = scmp.ne.s32.totalorder %s411, %s412
      %p423 = scmp.eq.s32.totalorder %s45, 0
      %p424 = por %p422, %p423
      %p425 = scmp.ne.s32.totalorder %s411, %s412
      %p426 = scmp.eq.s32.totalorder %s46, 3
      %p427 = por %p425, %p426
      %p429 = scmp.ne.s32.totalorder %s412, %s428
      %p430 = scmp.eq.s32.totalorder %s46, 0
      %p431 = por %p429, %p430
      %p432 = scmp.le.s32.totalorder 1, %s40
      %p433 = scmp.lt.s32.totalorder %s40, 5
      %p434 = pnand %p432, %p433
      %p435 = pneg %p434
      // Predicated region
      $region9: #{tpu_custom_call.1} parent=5 // pred_check
        _
      $region10: #{tpu_custom_call.1} parent=5 // pred_check_branch
        %437 = sbr.rel (%p434) target = $region12
      $region11: #{tpu_custom_call.1} parent=5 // pred_region
        %s438 = ssub.s32 %s40, 1
        // Predicated region
        $region13: #{tpu_custom_call.1} parent=11 // pred_check
          %p439 = pneg %p235
        $region14: #{tpu_custom_call.1} parent=11 // pred_check_branch
          %441 = sbr.rel (%p439) target = $region16
        $region15: #{tpu_custom_call.1} parent=11 // pred_region
          %s443 = ssub.s32 1024, 1024
          %444 = vsyncadd [#allocation12], %s443
          %s445 = sshll.u32 [#allocation13], 4
          %s446 = int_to_ptr.vmem [resolvable:$true] %s445
          %451 = dma.hbm_to_vmem [thread:$0]  %s6, 1024, %s446, [#allocation12], 64, 64, 4
        $region16: #{tpu_custom_call.1} parent=11 // pred_fallthru
          _
        // Predicated region
        $region17: #{tpu_custom_call.1} parent=11 // pred_check
          %p452 = pneg %p256
        $region18: #{tpu_custom_call.1} parent=11 // pred_check_branch
          %454 = sbr.rel (%p452) target = $region20
        $region19: #{tpu_custom_call.1} parent=11 // pred_region
          %s456 = ssub.s32 1024, 1024
          %457 = vsyncadd [#allocation15], %s456
          %s458 = sshll.u32 [#allocation14], 4
          %s459 = int_to_ptr.vmem [resolvable:$true] %s458
          %464 = dma.hbm_to_vmem [thread:$0]  %s7, 1024, %s459, [#allocation15], 64, 64, 4
        $region20: #{tpu_custom_call.1} parent=11 // pred_fallthru
          _
        // Predicated region
        $region21: #{tpu_custom_call.1} parent=11 // pred_check
          %p465 = pneg %p277
        $region22: #{tpu_custom_call.1} parent=11 // pred_check_branch
          %467 = sbr.rel (%p465) target = $region24
        $region23: #{tpu_custom_call.1} parent=11 // pred_region
          %s469 = ssub.s32 1024, 1024
          %470 = vsyncadd [#allocation15], %s469
          %s471 = sshll.u32 [#allocation16], 4
          %s472 = int_to_ptr.vmem [resolvable:$true] %s471
          %477 = dma.hbm_to_vmem [thread:$0]  %s8, 1024, %s472, [#allocation15], 64, 64, 4
        $region24: #{tpu_custom_call.1} parent=11 // pred_fallthru
          _
        // Predicated region
        $region25: #{tpu_custom_call.1} parent=11 // pred_check
          %p478 = pneg %p298
        $region26: #{tpu_custom_call.1} parent=11 // pred_check_branch
          %480 = sbr.rel (%p478) target = $region28
        $region27: #{tpu_custom_call.1} parent=11 // pred_region
          _
        $region28: #{tpu_custom_call.1} parent=11 // pred_fallthru
          _
        // Predicated region
        $region29: #{tpu_custom_call.1} parent=11 // pred_check
          %p481 = pneg %p319
        $region30: #{tpu_custom_call.1} parent=11 // pred_check_branch
          %483 = sbr.rel (%p481) target = $region32
        $region31: #{tpu_custom_call.1} parent=11 // pred_region
          _
        $region32: #{tpu_custom_call.1} parent=11 // pred_fallthru
          _
        // Predicated region
        $region33: #{tpu_custom_call.1} parent=11 // pred_check
          %p484 = pneg %p340
        $region34: #{tpu_custom_call.1} parent=11 // pred_check_branch
          %486 = sbr.rel (%p484) target = $region36
        $region35: #{tpu_custom_call.1} parent=11 // pred_region
          _
        $region36: #{tpu_custom_call.1} parent=11 // pred_fallthru
          _
      $region12: #{tpu_custom_call.1} parent=5 // pred_fallthru
        _
      %p487 = scmp.lt.s32.totalorder %s40, 4
      // Predicated region
      $region37: #{tpu_custom_call.1} parent=5 // pred_check
        %p488 = pneg %p487
      $region38: #{tpu_custom_call.1} parent=5 // pred_check_branch
        %490 = sbr.rel (%p488) target = $region40
      $region39: #{tpu_custom_call.1} parent=5 // pred_region
        // Predicated region
        $region41: #{tpu_custom_call.1} parent=39 // pred_check
          %p491 = pneg %p74
        $region42: #{tpu_custom_call.1} parent=39 // pred_check_branch
          %493 = sbr.rel (%p491) target = $region44
        $region43: #{tpu_custom_call.1} parent=39 // pred_region
          %s494 = sand.u32 %s64, 1
          %s495 = scalar_lea.sflag [#allocation3], %s494
          %s496 = sand.u32 %s64, 1
          %s497 = smul.addr %s496, 8
          %s498 = scalar_lea.vmem [#allocation2], %s497
          %s500 = ssub.s32 128, 128
          %501 = vsyncadd %s495, %s500
          %s502 = smul.addr %s47, 2
          %s503 = sadd.s32 %s48, %s502
          %s504 = smul.addr %s503, 128
          %s505 = scalar_lea.hbm %s0, %s504
          %s507 = sshll.u32 %s498, 4
          %s508 = int_to_ptr.vmem [resolvable:$true] %s507
          %510 = dma.hbm_to_vmem [thread:$0]  %s505, 128, %s508, %s495
        $region44: #{tpu_custom_call.1} parent=39 // pred_fallthru
          _
        // Predicated region
        $region45: #{tpu_custom_call.1} parent=39 // pred_check
          %p511 = pneg %p102
        $region46: #{tpu_custom_call.1} parent=39 // pred_check_branch
          %513 = sbr.rel (%p511) target = $region48
        $region47: #{tpu_custom_call.1} parent=39 // pred_region
          %s514 = sand.u32 %s40, 1
          %s515 = scalar_lea.sflag [#allocation6], %s514
          %s516 = sand.u32 %s92, 1
          %s517 = smul.addr %s516, 8
          %s518 = scalar_lea.vmem [#allocation5], %s517
          %s520 = ssub.s32 128, 128
          %521 = vsyncadd %s515, %s520
          %s522 = smul.addr %s47, 2
          %s523 = sadd.s32 %s48, %s522
          %s524 = smul.addr %s523, 128
          %s525 = scalar_lea.hbm %s1, %s524
          %s527 = sshll.u32 %s518, 4
          %s528 = int_to_ptr.vmem [resolvable:$true] %s527
          %530 = dma.hbm_to_vmem [thread:$0]  %s525, 128, %s528, %s515
        $region48: #{tpu_custom_call.1} parent=39 // pred_fallthru
          _
        // Predicated region
        $region49: #{tpu_custom_call.1} parent=39 // pred_check
          %p531 = pneg %p130
        $region50: #{tpu_custom_call.1} parent=39 // pred_check_branch
          %533 = sbr.rel (%p531) target = $region52
        $region51: #{tpu_custom_call.1} parent=39 // pred_region
          %s534 = sand.u32 %s40, 1
          %s535 = scalar_lea.sflag [#allocation6], %s534
          %s536 = sand.u32 %s120, 1
          %s537 = smul.addr %s536, 8
          %s538 = scalar_lea.vmem [#allocation7], %s537
          %s540 = ssub.s32 128, 128
          %541 = vsyncadd %s535, %s540
          %s542 = smul.addr %s47, 2
          %s543 = sadd.s32 %s48, %s542
          %s544 = smul.addr %s543, 128
          %s545 = scalar_lea.hbm %s2, %s544
          %s547 = sshll.u32 %s538, 4
          %s548 = int_to_ptr.vmem [resolvable:$true] %s547
          %550 = dma.hbm_to_vmem [thread:$0]  %s545, 128, %s548, %s535
        $region52: #{tpu_custom_call.1} parent=39 // pred_fallthru
          _
        // Predicated region
        $region53: #{tpu_custom_call.1} parent=39 // pred_check
          %p551 = pneg %p156
        $region54: #{tpu_custom_call.1} parent=39 // pred_check_branch
          %553 = sbr.rel (%p551) target = $region56
        $region55: #{tpu_custom_call.1} parent=39 // pred_region
          %s554 = sand.u32 %s40, 1
          %s555 = scalar_lea.sflag [#allocation9], %s554
          %s556 = sand.u32 %s146, 1
          %s557 = smul.addr %s556, 8
          %s558 = scalar_lea.vmem [#allocation8], %s557
          %s560 = ssub.s32 128, 128
          %561 = vsyncadd %s555, %s560
          %s562 = smul.addr %s47, 128
          %s563 = scalar_lea.hbm %s3, %s562
          %s565 = sshll.u32 %s558, 4
          %s566 = int_to_ptr.vmem [resolvable:$true] %s565
          %568 = dma.hbm_to_vmem [thread:$0]  %s563, 128, %s566, %s555
        $region56: #{tpu_custom_call.1} parent=39 // pred_fallthru
          _
        // Predicated region
        $region57: #{tpu_custom_call.1} parent=39 // pred_check
          %p569 = pneg %p182
        $region58: #{tpu_custom_call.1} parent=39 // pred_check_branch
          %571 = sbr.rel (%p569) target = $region60
        $region59: #{tpu_custom_call.1} parent=39 // pred_region
          %s572 = sand.u32 %s40, 1
          %s573 = scalar_lea.sflag [#allocation9], %s572
          %s574 = sand.u32 %s172, 1
          %s575 = smul.addr %s574, 8
          %s576 = scalar_lea.vmem [#allocation10], %s575
          %s578 = ssub.s32 128, 128
          %579 = vsyncadd %s573, %s578
          %s580 = smul.addr %s47, 128
          %s581 = scalar_lea.hbm %s4, %s580
          %s583 = sshll.u32 %s576, 4
          %s584 = int_to_ptr.vmem [resolvable:$true] %s583
          %586 = dma.hbm_to_vmem [thread:$0]  %s581, 128, %s584, %s573
        $region60: #{tpu_custom_call.1} parent=39 // pred_fallthru
          _
        // Predicated region
        $region61: #{tpu_custom_call.1} parent=39 // pred_check
          %p587 = pneg %p208
        $region62: #{tpu_custom_call.1} parent=39 // pred_check_branch
          %589 = sbr.rel (%p587) target = $region64
        $region63: #{tpu_custom_call.1} parent=39 // pred_region
          %s590 = sand.u32 %s40, 1
          %s591 = scalar_lea.sflag [#allocation12], %s590
          %s592 = sand.u32 %s198, 1
          %s593 = smul.addr %s592, 8
          %s594 = scalar_lea.vmem [#allocation11], %s593
          %s596 = ssub.s32 128, 128
          %597 = vsyncadd %s591, %s596
          %s598 = smul.addr %s47, 128
          %s599 = scalar_lea.hbm %s5, %s598
          %s601 = sshll.u32 %s594, 4
          %s602 = int_to_ptr.vmem [resolvable:$true] %s601
          %604 = dma.hbm_to_vmem [thread:$0]  %s599, 128, %s602, %s591
        $region64: #{tpu_custom_call.1} parent=39 // pred_fallthru
          _
      $region40: #{tpu_custom_call.1} parent=5 // pred_fallthru
        _
      %p605 = scmp.le.s32.totalorder 1, %s40
      %p606 = scmp.lt.s32.totalorder %s40, 5
      %p607 = pnand %p605, %p606
      %p608 = pneg %p607
      // Predicated region
      $region65: #{tpu_custom_call.1} parent=5 // pred_check
        _
      $region66: #{tpu_custom_call.1} parent=5 // pred_check_branch
        %610 = sbr.rel (%p607) target = $region68
      $region67: #{tpu_custom_call.1} parent=5 // pred_region
        %s611 = ssub.s32 %s40, 1
        %s612 = sand.u32 %s67, 1
        %s613 = scalar_lea.sflag [#allocation3], %s612
        %s614 = sand.u32 %s67, 1
        %s615 = smul.addr %s614, 8
        %s616 = scalar_lea.vmem [#allocation2], %s615
        // Predicated region
        $region69: #{tpu_custom_call.1} parent=67 // pred_check
          %p617 = pneg %p80
        $region70: #{tpu_custom_call.1} parent=67 // pred_check_branch
          %619 = sbr.rel (%p617) target = $region72
        $region71: #{tpu_custom_call.1} parent=67 // pred_region
          %620 = dma.done %s613, 128
        $region72: #{tpu_custom_call.1} parent=67 // pred_fallthru
          _
        %s621 = sand.u32 %s45, 1
        %s622 = scalar_lea.sflag [#allocation6], %s621
        %s623 = sand.u32 %s95, 1
        %s624 = smul.addr %s623, 8
        %s625 = scalar_lea.vmem [#allocation5], %s624
        // Predicated region
        $region73: #{tpu_custom_call.1} parent=67 // pred_check
          %p626 = pneg %p108
        $region74: #{tpu_custom_call.1} parent=67 // pred_check_branch
          %628 = sbr.rel (%p626) target = $region76
        $region75: #{tpu_custom_call.1} parent=67 // pred_region
          %629 = dma.done %s622, 128
        $region76: #{tpu_custom_call.1} parent=67 // pred_fallthru
          _
        %s630 = sand.u32 %s45, 1
        %s631 = scalar_lea.sflag [#allocation6], %s630
        %s632 = sand.u32 %s123, 1
        %s633 = smul.addr %s632, 8
        %s634 = scalar_lea.vmem [#allocation7], %s633
        // Predicated region
        $region77: #{tpu_custom_call.1} parent=67 // pred_check
          %p635 = pneg %p136
        $region78: #{tpu_custom_call.1} parent=67 // pred_check_branch
          %637 = sbr.rel (%p635) target = $region80
        $region79: #{tpu_custom_call.1} parent=67 // pred_region
          %638 = dma.done %s631, 128
        $region80: #{tpu_custom_call.1} parent=67 // pred_fallthru
          _
        %s639 = sand.u32 %s45, 1
        %s640 = scalar_lea.sflag [#allocation9], %s639
        %s641 = sand.u32 %s149, 1
        %s642 = smul.addr %s641, 8
        %s643 = scalar_lea.vmem [#allocation8], %s642
        // Predicated region
        $region81: #{tpu_custom_call.1} parent=67 // pred_check
          %p644 = pneg %p162
        $region82: #{tpu_custom_call.1} parent=67 // pred_check_branch
          %646 = sbr.rel (%p644) target = $region84
        $region83: #{tpu_custom_call.1} parent=67 // pred_region
          %647 = dma.done %s640, 128
        $region84: #{tpu_custom_call.1} parent=67 // pred_fallthru
          _
        %s648 = sand.u32 %s45, 1
        %s649 = scalar_lea.sflag [#allocation9], %s648
        %s650 = sand.u32 %s175, 1
        %s651 = smul.addr %s650, 8
        %s652 = scalar_lea.vmem [#allocation10], %s651
        // Predicated region
        $region85: #{tpu_custom_call.1} parent=67 // pred_check
          %p653 = pneg %p188
        $region86: #{tpu_custom_call.1} parent=67 // pred_check_branch
          %655 = sbr.rel (%p653) target = $region88
        $region87: #{tpu_custom_call.1} parent=67 // pred_region
          %656 = dma.done %s649, 128
        $region88: #{tpu_custom_call.1} parent=67 // pred_fallthru
          _
        %s657 = sand.u32 %s45, 1
        %s658 = scalar_lea.sflag [#allocation12], %s657
        %s659 = sand.u32 %s201, 1
        %s660 = smul.addr %s659, 8
        %s661 = scalar_lea.vmem [#allocation11], %s660
        // Predicated region
        $region89: #{tpu_custom_call.1} parent=67 // pred_check
          %p662 = pneg %p214
        $region90: #{tpu_custom_call.1} parent=67 // pred_check_branch
          %664 = sbr.rel (%p662) target = $region92
        $region91: #{tpu_custom_call.1} parent=67 // pred_region
          %665 = dma.done %s658, 128
        $region92: #{tpu_custom_call.1} parent=67 // pred_fallthru
          _
        // Predicated region
        $region93: #{tpu_custom_call.1} parent=67 // pred_check
          %p666 = pneg %p235
        $region94: #{tpu_custom_call.1} parent=67 // pred_check_branch
          %668 = sbr.rel (%p666) target = $region96
        $region95: #{tpu_custom_call.1} parent=67 // pred_region
          %669 = dma.done [#allocation12], 1024
        $region96: #{tpu_custom_call.1} parent=67 // pred_fallthru
          _
        // Predicated region
        $region97: #{tpu_custom_call.1} parent=67 // pred_check
          %p670 = pneg %p256
        $region98: #{tpu_custom_call.1} parent=67 // pred_check_branch
          %672 = sbr.rel (%p670) target = $region100
        $region99: #{tpu_custom_call.1} parent=67 // pred_region
          %673 = dma.done [#allocation15], 1024
        $region100: #{tpu_custom_call.1} parent=67 // pred_fallthru
          _
        // Predicated region
        $region101: #{tpu_custom_call.1} parent=67 // pred_check
          %p674 = pneg %p277
        $region102: #{tpu_custom_call.1} parent=67 // pred_check_branch
          %676 = sbr.rel (%p674) target = $region104
        $region103: #{tpu_custom_call.1} parent=67 // pred_region
          %677 = dma.done [#allocation15], 1024
        $region104: #{tpu_custom_call.1} parent=67 // pred_fallthru
          _
        %s678 = sand.u32 %s67, 1
        %s679 = scalar_lea.sflag [#allocation3], %s678
        %s680 = sand.u32 %s67, 1
        %s681 = smul.addr %s680, 8
        %s682 = scalar_lea.vmem [#allocation2], %s681
        %p683 = pneg %p80
        %p684 = pneg %p77
        %s685 = sand.u32 %s45, 1
        %s686 = scalar_lea.sflag [#allocation6], %s685
        %s687 = sand.u32 %s95, 1
        %s688 = smul.addr %s687, 8
        %s689 = scalar_lea.vmem [#allocation5], %s688
        %p690 = pneg %p108
        %p691 = pneg %p105
        %s692 = sand.u32 %s45, 1
        %s693 = scalar_lea.sflag [#allocation6], %s692
        %s694 = sand.u32 %s123, 1
        %s695 = smul.addr %s694, 8
        %s696 = scalar_lea.vmem [#allocation7], %s695
        %p697 = pneg %p136
        %p698 = pneg %p133
        %s699 = sand.u32 %s45, 1
        %s700 = scalar_lea.sflag [#allocation9], %s699
        %s701 = sand.u32 %s149, 1
        %s702 = smul.addr %s701, 8
        %s703 = scalar_lea.vmem [#allocation8], %s702
        %p704 = pneg %p162
        %p705 = pneg %p159
        %s706 = sand.u32 %s45, 1
        %s707 = scalar_lea.sflag [#allocation9], %s706
        %s708 = sand.u32 %s175, 1
        %s709 = smul.addr %s708, 8
        %s710 = scalar_lea.vmem [#allocation10], %s709
        %p711 = pneg %p188
        %p712 = pneg %p185
        %s713 = sand.u32 %s45, 1
        %s714 = scalar_lea.sflag [#allocation12], %s713
        %s715 = sand.u32 %s201, 1
        %s716 = smul.addr %s715, 8
        %s717 = scalar_lea.vmem [#allocation11], %s716
        %p718 = pneg %p214
        %p719 = pneg %p211
        %p720 = pneg %p235
        %p721 = pneg %p232
        %p722 = pneg %p256
        %p723 = pneg %p253
        %p724 = pneg %p277
        %p725 = pneg %p274
        %p726 = pneg %p298
        %p727 = pneg %p295
        %p728 = pneg %p319
        %p729 = pneg %p316
        %p730 = pneg %p340
        %p731 = pneg %p337
        %p732 = pneg %p368
        %p733 = pneg %p365
        %s734 = sand.u32 %s355, 1
        %s735 = scalar_lea.sflag [#allocation4], %s734
        %s736 = sand.u32 %s355, 1
        %s737 = smul.addr %s736, 16
        %s738 = scalar_lea.vmem [#allocation17], %s737
        %p739 = pneg %p396
        %p740 = pneg %p393
        %s741 = sand.u32 %s45, 1
        %s742 = scalar_lea.sflag [#allocation19], %s741
        %s743 = sand.u32 %s383, 1
        %s744 = smul.addr %s743, 16
        %s745 = scalar_lea.vmem [#allocation18], %s744
        %p746 = pneg %p424
        %p747 = pneg %p421
        %s748 = sand.u32 %s45, 1
        %s749 = scalar_lea.sflag [#allocation19], %s748
        %s750 = sand.u32 %s411, 1
        %s751 = smul.addr %s750, 16
        %s752 = scalar_lea.vmem [#allocation20], %s751
        %v754 = vld [vmem:[%s643] sm:$0xff]
        %v755 = vld [vmem:[%s652] sm:$0xff]
        %v756 = vld [vmem:[%s661] sm:$0xff]
        %v757 = vld [vmem:[%s616] sm:$0xff]
        %v758 = vmul.f32 %v757, %v754
        %760 = vrot.lane.b32.xlu0 %v757, 112
        %v761 = vpop.permute.xlu0 %760
        %v763 = vmul.f32 %v761, %v755
        %v764 = vadd.f32 %v758, %v763
        %765 = vrot.lane.b32.xlu0 %v757, 16
        %v766 = vpop.permute.xlu0 %765
        %v768 = vmul.f32 %v766, %v756
        %v769 = vadd.f32 %v764, %v768
        %v770 = vpack.c.bf16 %v769, %v769
        %v771 = vld [vmem:[#allocation13] sm:$0xf]
        %v772 = vld [vmem:[#allocation13 + $0x4] sm:$0xf]
        %v773 = vld [vmem:[#allocation13 + $0x8] sm:$0xf]
        %v774 = vld [vmem:[#allocation13 + $0xc] sm:$0xf]
        %v775 = vld [vmem:[#allocation13 + $0x10] sm:$0xf]
        %v776 = vld [vmem:[#allocation13 + $0x14] sm:$0xf]
        %v777 = vld [vmem:[#allocation13 + $0x18] sm:$0xf]
        %v778 = vld [vmem:[#allocation13 + $0x1c] sm:$0xf]
        %v779 = vld [vmem:[#allocation13 + $0x20] sm:$0xf]
        %v780 = vld [vmem:[#allocation13 + $0x24] sm:$0xf]
        %v781 = vld [vmem:[#allocation13 + $0x28] sm:$0xf]
        %v782 = vld [vmem:[#allocation13 + $0x2c] sm:$0xf]
        %v783 = vld [vmem:[#allocation13 + $0x30] sm:$0xf]
        %v784 = vld [vmem:[#allocation13 + $0x34] sm:$0xf]
        %v785 = vld [vmem:[#allocation13 + $0x38] sm:$0xf]
        %v786 = vld [vmem:[#allocation13 + $0x3c] sm:$0xf]
        %v787 = vld [vmem:[%s9] sm:$0x1]
        %v789 = vlaneseq
        %v790 = vshrl.u32 %v789, 7
        %v791 = vsub.s32 0, %v790
        %v792 = vrot.slane %v787, %v791
        %v810 = vunpack.c.l.b16 %v771
        %v811 = vunpack.c.l.b16 %v772
        %v812 = vunpack.c.l.b16 %v773
        %v813 = vunpack.c.l.b16 %v774
        %v814 = vunpack.c.l.b16 %v775
        %v815 = vunpack.c.l.b16 %v776
        %v816 = vunpack.c.l.b16 %v777
        %v817 = vunpack.c.l.b16 %v778
        %v818 = vunpack.c.l.b16 %v779
        %v819 = vunpack.c.l.b16 %v780
        %v820 = vunpack.c.l.b16 %v781
        %v821 = vunpack.c.l.b16 %v782
        %v822 = vunpack.c.l.b16 %v783
        %v823 = vunpack.c.l.b16 %v784
        %v824 = vunpack.c.l.b16 %v785
        %v825 = vunpack.c.l.b16 %v786
        %v826 = vpack.c.b16 %v811, %v810
        %v827 = vpack.c.b16 %v813, %v812
        %v828 = vpack.c.b16 %v815, %v814
        %v829 = vpack.c.b16 %v817, %v816
        %v830 = vpack.c.b16 %v819, %v818
        %v831 = vpack.c.b16 %v821, %v820
        %v832 = vpack.c.b16 %v823, %v822
        %v833 = vpack.c.b16 %v825, %v824
        %842 = vmatprep.subr.bf16.mxu0 0
        %843 = vmatpush1.bf16.msra.mxu0 %v833
        %844 = vmatprep.subr.bf16.mxu0 0
        %845 = vmatpush1.bf16.msra.mxu0 %v832
        %846 = vmatprep.subr.bf16.mxu0 0
        %847 = vmatpush1.bf16.msra.mxu0 %v831
        %848 = vmatprep.subr.bf16.mxu0 0
        %849 = vmatpush1.bf16.msra.mxu0 %v830
        %850 = vmatprep.subr.bf16.mxu0 0
        %851 = vmatpush1.bf16.msra.mxu0 %v829
        %852 = vmatprep.subr.bf16.mxu0 0
        %853 = vmatpush1.bf16.msra.mxu0 %v828
        %854 = vmatprep.subr.bf16.mxu0 0
        %855 = vmatpush1.bf16.msra.mxu0 %v827
        %856 = vmatprep.subr.bf16.mxu0 0
        %857 = vmatpush1.bf16.msra.mxu0 %v826
        %858 = vmatprep.subr.bf16.mxu0 0
        %859 = vmatpush2.bf16.msra.mxu0 0
        %860 = vmatprep.subr.bf16.mxu0 0
        %861 = vmatpush2.bf16.msra.mxu0 0
        %862 = vmatprep.subr.bf16.mxu0 0
        %863 = vmatpush2.bf16.msra.mxu0 0
        %864 = vmatprep.subr.bf16.mxu0 0
        %865 = vmatpush2.bf16.msra.mxu0 0
        %866 = vmatprep.subr.bf16.mxu0 0
        %867 = vmatpush2.bf16.msra.mxu0 0
        %868 = vmatprep.subr.bf16.mxu0 0
        %869 = vmatpush2.bf16.msra.mxu0 0
        %870 = vmatprep.subr.bf16.mxu0 0
        %871 = vmatpush2.bf16.msra.mxu0 0
        %872 = vmatprep.subr.bf16.mxu0 0
        %873 = vmatpush2.bf16.msra.mxu0 0
        %874 = vmatprep.mubr.bf16.mxu0 0
        %875 = vmatmul.mubr.bf16.gmra.mxu0 %v770
        %v876 = vpop.f32.mrf.mxu0
        %v877 = vadd.f32 %v792, %v876
        %v878 = vpop.f32.mrf.mxu0
        %v879 = vpop.f32.mrf.mxu0
        %v880 = vpop.f32.mrf.mxu0
        %881 = vdwg.mxu0
        %v882 = vpack.c.bf16 %v877, %v877
        %vm883 = vcmask 257024
        %884 = vst.msk [vmem:[%s738] sm:$0xf] %vm883, %v882
        %v886 = vunpack.c.l.b16 %v882
        %v887 = vpack.c.b16 %v886, %v886
        %888 = vrot.lane.b32.xlu0 %v887, 96
        %v889 = vpop.permute.xlu0 %888
        %s891 = scalar_lea.vmem %s738, 4 [#allocation17]
        %892 = vst.msk [vmem:[%s891] sm:$0xf] %vm883, %v889
        %893 = vrot.lane.b32.xlu0 %v887, 64
        %v894 = vpop.permute.xlu0 %893
        %s896 = scalar_lea.vmem %s738, 8 [#allocation17]
        %897 = vst.msk [vmem:[%s896] sm:$0xf] %vm883, %v894
        %898 = vrot.lane.b32.xlu0 %v887, 32
        %v899 = vpop.permute.xlu0 %898
        %s901 = scalar_lea.vmem %s738, 12 [#allocation17]
        %902 = vst.msk [vmem:[%s901] sm:$0xf] %vm883, %v899
        %v903 = vld [vmem:[%s625] sm:$0xff]
        %v904 = vmul.f32 %v903, %v754
        %906 = vrot.lane.b32.xlu0 %v903, 112
        %v907 = vpop.permute.xlu0 %906
        %v909 = vmul.f32 %v907, %v755
        %v910 = vadd.f32 %v904, %v909
        %911 = vrot.lane.b32.xlu0 %v903, 16
        %v912 = vpop.permute.xlu0 %911
        %v914 = vmul.f32 %v912, %v756
        %v915 = vadd.f32 %v910, %v914
        %v916 = vpack.c.bf16 %v915, %v915
        %v917 = vld [vmem:[#allocation14] sm:$0xf]
        %v918 = vld [vmem:[#allocation14 + $0x4] sm:$0xf]
        %v919 = vld [vmem:[#allocation14 + $0x8] sm:$0xf]
        %v920 = vld [vmem:[#allocation14 + $0xc] sm:$0xf]
        %v921 = vld [vmem:[#allocation14 + $0x10] sm:$0xf]
        %v922 = vld [vmem:[#allocation14 + $0x14] sm:$0xf]
        %v923 = vld [vmem:[#allocation14 + $0x18] sm:$0xf]
        %v924 = vld [vmem:[#allocation14 + $0x1c] sm:$0xf]
        %v925 = vld [vmem:[#allocation14 + $0x20] sm:$0xf]
        %v926 = vld [vmem:[#allocation14 + $0x24] sm:$0xf]
        %v927 = vld [vmem:[#allocation14 + $0x28] sm:$0xf]
        %v928 = vld [vmem:[#allocation14 + $0x2c] sm:$0xf]
        %v929 = vld [vmem:[#allocation14 + $0x30] sm:$0xf]
        %v930 = vld [vmem:[#allocation14 + $0x34] sm:$0xf]
        %v931 = vld [vmem:[#allocation14 + $0x38] sm:$0xf]
        %v932 = vld [vmem:[#allocation14 + $0x3c] sm:$0xf]
        %v933 = vld [vmem:[%s10] sm:$0x1]
        %v935 = vlaneseq
        %v936 = vshrl.u32 %v935, 7
        %v937 = vsub.s32 0, %v936
        %v938 = vrot.slane %v933, %v937
        %v956 = vunpack.c.l.b16 %v917
        %v957 = vunpack.c.l.b16 %v918
        %v958 = vunpack.c.l.b16 %v919
        %v959 = vunpack.c.l.b16 %v920
        %v960 = vunpack.c.l.b16 %v921
        %v961 = vunpack.c.l.b16 %v922
        %v962 = vunpack.c.l.b16 %v923
        %v963 = vunpack.c.l.b16 %v924
        %v964 = vunpack.c.l.b16 %v925
        %v965 = vunpack.c.l.b16 %v926
        %v966 = vunpack.c.l.b16 %v927
        %v967 = vunpack.c.l.b16 %v928
        %v968 = vunpack.c.l.b16 %v929
        %v969 = vunpack.c.l.b16 %v930
        %v970 = vunpack.c.l.b16 %v931
        %v971 = vunpack.c.l.b16 %v932
        %v972 = vpack.c.b16 %v957, %v956
        %v973 = vpack.c.b16 %v959, %v958
        %v974 = vpack.c.b16 %v961, %v960
        %v975 = vpack.c.b16 %v963, %v962
        %v976 = vpack.c.b16 %v965, %v964
        %v977 = vpack.c.b16 %v967, %v966
        %v978 = vpack.c.b16 %v969, %v968
        %v979 = vpack.c.b16 %v971, %v970
        %988 = vmatprep.subr.bf16.mxu0 0
        %989 = vmatpush1.bf16.msra.mxu0 %v979
        %990 = vmatprep.subr.bf16.mxu0 0
        %991 = vmatpush1.bf16.msra.mxu0 %v978
        %992 = vmatprep.subr.bf16.mxu0 0
        %993 = vmatpush1.bf16.msra.mxu0 %v977
        %994 = vmatprep.subr.bf16.mxu0 0
        %995 = vmatpush1.bf16.msra.mxu0 %v976
        %996 = vmatprep.subr.bf16.mxu0 0
        %997 = vmatpush1.bf16.msra.mxu0 %v975
        %998 = vmatprep.subr.bf16.mxu0 0
        %999 = vmatpush1.bf16.msra.mxu0 %v974
        %1000 = vmatprep.subr.bf16.mxu0 0
        %1001 = vmatpush1.bf16.msra.mxu0 %v973
        %1002 = vmatprep.subr.bf16.mxu0 0
        %1003 = vmatpush1.bf16.msra.mxu0 %v972
        %1004 = vmatprep.subr.bf16.mxu0 0
        %1005 = vmatpush2.bf16.msra.mxu0 0
        %1006 = vmatprep.subr.bf16.mxu0 0
        %1007 = vmatpush2.bf16.msra.mxu0 0
        %1008 = vmatprep.subr.bf16.mxu0 0
        %1009 = vmatpush2.bf16.msra.mxu0 0
        %1010 = vmatprep.subr.bf16.mxu0 0
        %1011 = vmatpush2.bf16.msra.mxu0 0
        %1012 = vmatprep.subr.bf16.mxu0 0
        %1013 = vmatpush2.bf16.msra.mxu0 0
        %1014 = vmatprep.subr.bf16.mxu0 0
        %1015 = vmatpush2.bf16.msra.mxu0 0
        %1016 = vmatprep.subr.bf16.mxu0 0
        %1017 = vmatpush2.bf16.msra.mxu0 0
        %1018 = vmatprep.subr.bf16.mxu0 0
        %1019 = vmatpush2.bf16.msra.mxu0 0
        %1020 = vmatprep.mubr.bf16.mxu0 0
        %1021 = vmatmul.mubr.bf16.gmra.mxu0 %v916
        %v1022 = vpop.f32.mrf.mxu0
        %v1023 = vadd.f32 %v938, %v1022
        %v1024 = vpop.f32.mrf.mxu0
        %v1025 = vpop.f32.mrf.mxu0
        %v1026 = vpop.f32.mrf.mxu0
        %1027 = vdwg.mxu0
        %v1028 = vpack.c.bf16 %v1023, %v1023
        %1029 = vst.msk [vmem:[%s745] sm:$0xf] %vm883, %v1028
        %v1031 = vunpack.c.l.b16 %v1028
        %v1032 = vpack.c.b16 %v1031, %v1031
        %1033 = vrot.lane.b32.xlu0 %v1032, 96
        %v1034 = vpop.permute.xlu0 %1033
        %s1036 = scalar_lea.vmem %s745, 4 [#allocation18]
        %1037 = vst.msk [vmem:[%s1036] sm:$0xf] %vm883, %v1034
        %1038 = vrot.lane.b32.xlu0 %v1032, 64
        %v1039 = vpop.permute.xlu0 %1038
        %s1041 = scalar_lea.vmem %s745, 8 [#allocation18]
        %1042 = vst.msk [vmem:[%s1041] sm:$0xf] %vm883, %v1039
        %1043 = vrot.lane.b32.xlu0 %v1032, 32
        %v1044 = vpop.permute.xlu0 %1043
        %s1046 = scalar_lea.vmem %s745, 12 [#allocation18]
        %1047 = vst.msk [vmem:[%s1046] sm:$0xf] %vm883, %v1044
        %v1048 = vld [vmem:[%s634] sm:$0xff]
        %v1049 = vpack.c.bf16 %v1048, %v1048
        %v1050 = vld [vmem:[#allocation16] sm:$0xf]
        %v1051 = vld [vmem:[#allocation16 + $0x4] sm:$0xf]
        %v1052 = vld [vmem:[#allocation16 + $0x8] sm:$0xf]
        %v1053 = vld [vmem:[#allocation16 + $0xc] sm:$0xf]
        %v1054 = vld [vmem:[#allocation16 + $0x10] sm:$0xf]
        %v1055 = vld [vmem:[#allocation16 + $0x14] sm:$0xf]
        %v1056 = vld [vmem:[#allocation16 + $0x18] sm:$0xf]
        %v1057 = vld [vmem:[#allocation16 + $0x1c] sm:$0xf]
        %v1058 = vld [vmem:[#allocation16 + $0x20] sm:$0xf]
        %v1059 = vld [vmem:[#allocation16 + $0x24] sm:$0xf]
        %v1060 = vld [vmem:[#allocation16 + $0x28] sm:$0xf]
        %v1061 = vld [vmem:[#allocation16 + $0x2c] sm:$0xf]
        %v1062 = vld [vmem:[#allocation16 + $0x30] sm:$0xf]
        %v1063 = vld [vmem:[#allocation16 + $0x34] sm:$0xf]
        %v1064 = vld [vmem:[#allocation16 + $0x38] sm:$0xf]
        %v1065 = vld [vmem:[#allocation16 + $0x3c] sm:$0xf]
        %v1066 = vld [vmem:[%s11] sm:$0x1]
        %v1068 = vlaneseq
        %v1069 = vshrl.u32 %v1068, 7
        %v1070 = vsub.s32 0, %v1069
        %v1071 = vrot.slane %v1066, %v1070
        %v1089 = vunpack.c.l.b16 %v1050
        %v1090 = vunpack.c.l.b16 %v1051
        %v1091 = vunpack.c.l.b16 %v1052
        %v1092 = vunpack.c.l.b16 %v1053
        %v1093 = vunpack.c.l.b16 %v1054
        %v1094 = vunpack.c.l.b16 %v1055
        %v1095 = vunpack.c.l.b16 %v1056
        %v1096 = vunpack.c.l.b16 %v1057
        %v1097 = vunpack.c.l.b16 %v1058
        %v1098 = vunpack.c.l.b16 %v1059
        %v1099 = vunpack.c.l.b16 %v1060
        %v1100 = vunpack.c.l.b16 %v1061
        %v1101 = vunpack.c.l.b16 %v1062
        %v1102 = vunpack.c.l.b16 %v1063
        %v1103 = vunpack.c.l.b16 %v1064
        %v1104 = vunpack.c.l.b16 %v1065
        %v1105 = vpack.c.b16 %v1090, %v1089
        %v1106 = vpack.c.b16 %v1092, %v1091
        %v1107 = vpack.c.b16 %v1094, %v1093
        %v1108 = vpack.c.b16 %v1096, %v1095
        %v1109 = vpack.c.b16 %v1098, %v1097
        %v1110 = vpack.c.b16 %v1100, %v1099
        %v1111 = vpack.c.b16 %v1102, %v1101
        %v1112 = vpack.c.b16 %v1104, %v1103
        %1121 = vmatprep.subr.bf16.mxu0 0
        %1122 = vmatpush1.bf16.msra.mxu0 %v1112
        %1123 = vmatprep.subr.bf16.mxu0 0
        %1124 = vmatpush1.bf16.msra.mxu0 %v1111
        %1125 = vmatprep.subr.bf16.mxu0 0
        %1126 = vmatpush1.bf16.msra.mxu0 %v1110
        %1127 = vmatprep.subr.bf16.mxu0 0
        %1128 = vmatpush1.bf16.msra.mxu0 %v1109
        %1129 = vmatprep.subr.bf16.mxu0 0
        %1130 = vmatpush1.bf16.msra.mxu0 %v1108
        %1131 = vmatprep.subr.bf16.mxu0 0
        %1132 = vmatpush1.bf16.msra.mxu0 %v1107
        %1133 = vmatprep.subr.bf16.mxu0 0
        %1134 = vmatpush1.bf16.msra.mxu0 %v1106
        %1135 = vmatprep.subr.bf16.mxu0 0
        %1136 = vmatpush1.bf16.msra.mxu0 %v1105
        %1137 = vmatprep.subr.bf16.mxu0 0
        %1138 = vmatpush2.bf16.msra.mxu0 0
        %1139 = vmatprep.subr.bf16.mxu0 0
        %1140 = vmatpush2.bf16.msra.mxu0 0
        %1141 = vmatprep.subr.bf16.mxu0 0
        %1142 = vmatpush2.bf16.msra.mxu0 0
        %1143 = vmatprep.subr.bf16.mxu0 0
        %1144 = vmatpush2.bf16.msra.mxu0 0
        %1145 = vmatprep.subr.bf16.mxu0 0
        %1146 = vmatpush2.bf16.msra.mxu0 0
        %1147 = vmatprep.subr.bf16.mxu0 0
        %1148 = vmatpush2.bf16.msra.mxu0 0
        %1149 = vmatprep.subr.bf16.mxu0 0
        %1150 = vmatpush2.bf16.msra.mxu0 0
        %1151 = vmatprep.subr.bf16.mxu0 0
        %1152 = vmatpush2.bf16.msra.mxu0 0
        %1153 = vmatprep.mubr.bf16.mxu0 0
        %1154 = vmatmul.mubr.bf16.gmra.mxu0 %v1049
        %v1155 = vpop.f32.mrf.mxu0
        %v1156 = vadd.f32 %v1071, %v1155
        %v1157 = vpop.f32.mrf.mxu0
        %v1158 = vpop.f32.mrf.mxu0
        %v1159 = vpop.f32.mrf.mxu0
        %1160 = vdwg.mxu0
        %v1161 = vpack.c.bf16 %v1156, %v1156
        %1162 = vst.msk [vmem:[%s752] sm:$0xf] %vm883, %v1161
        %v1164 = vunpack.c.l.b16 %v1161
        %v1165 = vpack.c.b16 %v1164, %v1164
        %1166 = vrot.lane.b32.xlu0 %v1165, 96
        %v1167 = vpop.permute.xlu0 %1166
        %s1169 = scalar_lea.vmem %s752, 4 [#allocation20]
        %1170 = vst.msk [vmem:[%s1169] sm:$0xf] %vm883, %v1167
        %1171 = vrot.lane.b32.xlu0 %v1165, 64
        %v1172 = vpop.permute.xlu0 %1171
        %s1174 = scalar_lea.vmem %s752, 8 [#allocation20]
        %1175 = vst.msk [vmem:[%s1174] sm:$0xf] %vm883, %v1172
        %1176 = vrot.lane.b32.xlu0 %v1165, 32
        %v1177 = vpop.permute.xlu0 %1176
        %s1179 = scalar_lea.vmem %s752, 12 [#allocation20]
        %1180 = vst.msk [vmem:[%s1179] sm:$0xf] %vm883, %v1177
        %s1181 = sand.u32 %s355, 1
        %s1182 = scalar_lea.sflag [#allocation4], %s1181
        %s1183 = sand.u32 %s355, 1
        %s1184 = smul.addr %s1183, 16
        %s1185 = scalar_lea.vmem [#allocation17], %s1184
        %s1186 = sand.u32 %s45, 1
        %s1187 = scalar_lea.sflag [#allocation19], %s1186
        %s1188 = sand.u32 %s383, 1
        %s1189 = smul.addr %s1188, 16
        %s1190 = scalar_lea.vmem [#allocation18], %s1189
        %s1191 = sand.u32 %s45, 1
        %s1192 = scalar_lea.sflag [#allocation19], %s1191
        %s1193 = sand.u32 %s411, 1
        %s1194 = smul.addr %s1193, 16
        %s1195 = scalar_lea.vmem [#allocation20], %s1194
        // Predicated region
        $region105: #{tpu_custom_call.1} parent=67 // pred_check
          %p1196 = pneg %p365
        $region106: #{tpu_custom_call.1} parent=67 // pred_check_branch
          %1198 = sbr.rel (%p1196) target = $region108
        $region107: #{tpu_custom_call.1} parent=67 // pred_region
          %s1200 = ssub.s32 256, 256
          %1201 = vsyncadd %s1182, %s1200
          %s1202 = smul.addr %s50, 8
          %s1203 = sadd.s32 %s49, %s1202
          %s1204 = smul.addr %s1203, 64
          %s1205 = scalar_lea.hbm %s12, %s1204
          %s1206 = sshll.u32 %s1185, 4
          %s1207 = int_to_ptr.vmem [resolvable:$true] %s1206
          %1212 = dma.vmem_to_hbm [thread:$0]  %s1207, 256, %s1205, %s1182, 64, 128, 4
        $region108: #{tpu_custom_call.1} parent=67 // pred_fallthru
          _
        // Predicated region
        $region109: #{tpu_custom_call.1} parent=67 // pred_check
          %p1213 = pneg %p393
        $region110: #{tpu_custom_call.1} parent=67 // pred_check_branch
          %1215 = sbr.rel (%p1213) target = $region112
        $region111: #{tpu_custom_call.1} parent=67 // pred_region
          %s1217 = ssub.s32 256, 256
          %1218 = vsyncadd %s1187, %s1217
          %s1219 = smul.addr %s50, 8
          %s1220 = sadd.s32 %s49, %s1219
          %s1221 = smul.addr %s1220, 64
          %s1222 = scalar_lea.hbm %s13, %s1221
          %s1223 = sshll.u32 %s1190, 4
          %s1224 = int_to_ptr.vmem [resolvable:$true] %s1223
          %1229 = dma.vmem_to_hbm [thread:$0]  %s1224, 256, %s1222, %s1187, 64, 128, 4
        $region112: #{tpu_custom_call.1} parent=67 // pred_fallthru
          _
        // Predicated region
        $region113: #{tpu_custom_call.1} parent=67 // pred_check
          %p1230 = pneg %p421
        $region114: #{tpu_custom_call.1} parent=67 // pred_check_branch
          %1232 = sbr.rel (%p1230) target = $region116
        $region115: #{tpu_custom_call.1} parent=67 // pred_region
          %s1234 = ssub.s32 256, 256
          %1235 = vsyncadd %s1192, %s1234
          %s1236 = smul.addr %s50, 8
          %s1237 = sadd.s32 %s49, %s1236
          %s1238 = smul.addr %s1237, 64
          %s1239 = scalar_lea.hbm %s14, %s1238
          %s1240 = sshll.u32 %s1195, 4
          %s1241 = int_to_ptr.vmem [resolvable:$true] %s1240
          %1246 = dma.vmem_to_hbm [thread:$0]  %s1241, 256, %s1239, %s1192, 64, 128, 4
        $region116: #{tpu_custom_call.1} parent=67 // pred_fallthru
          _
      $region68: #{tpu_custom_call.1} parent=5 // pred_fallthru
        _
      %p1247 = scmp.le.s32.totalorder 2, %s40
      // Predicated region
      $region117: #{tpu_custom_call.1} parent=5 // pred_check
        %p1248 = pneg %p1247
      $region118: #{tpu_custom_call.1} parent=5 // pred_check_branch
        %1250 = sbr.rel (%p1248) target = $region120
      $region119: #{tpu_custom_call.1} parent=5 // pred_region
        %s1251 = ssub.s32 %s40, 2
        // Predicated region
        $region121: #{tpu_custom_call.1} parent=119 // pred_check
          %p1252 = pneg %p371
        $region122: #{tpu_custom_call.1} parent=119 // pred_check_branch
          %1254 = sbr.rel (%p1252) target = $region124
        $region123: #{tpu_custom_call.1} parent=119 // pred_region
          %s1255 = sand.u32 %s356, 1
          %s1256 = scalar_lea.sflag [#allocation4], %s1255
          %s1257 = sand.u32 %s356, 1
          %s1258 = smul.addr %s1257, 16
          %s1259 = scalar_lea.vmem [#allocation17], %s1258
          %1260 = dma.done %s1256, 256
        $region124: #{tpu_custom_call.1} parent=119 // pred_fallthru
          _
        // Predicated region
        $region125: #{tpu_custom_call.1} parent=119 // pred_check
          %p1261 = pneg %p399
        $region126: #{tpu_custom_call.1} parent=119 // pred_check_branch
          %1263 = sbr.rel (%p1261) target = $region128
        $region127: #{tpu_custom_call.1} parent=119 // pred_region
          %s1264 = sand.u32 %s46, 1
          %s1265 = scalar_lea.sflag [#allocation19], %s1264
          %s1266 = sand.u32 %s384, 1
          %s1267 = smul.addr %s1266, 16
          %s1268 = scalar_lea.vmem [#allocation18], %s1267
          %1269 = dma.done %s1265, 256
        $region128: #{tpu_custom_call.1} parent=119 // pred_fallthru
          _
        // Predicated region
        $region129: #{tpu_custom_call.1} parent=119 // pred_check
          %p1270 = pneg %p427
        $region130: #{tpu_custom_call.1} parent=119 // pred_check_branch
          %1272 = sbr.rel (%p1270) target = $region132
        $region131: #{tpu_custom_call.1} parent=119 // pred_region
          %s1273 = sand.u32 %s46, 1
          %s1274 = scalar_lea.sflag [#allocation19], %s1273
          %s1275 = sand.u32 %s412, 1
          %s1276 = smul.addr %s1275, 16
          %s1277 = scalar_lea.vmem [#allocation20], %s1276
          %1278 = dma.done %s1274, 256
        $region132: #{tpu_custom_call.1} parent=119 // pred_fallthru
          _
      $region120: #{tpu_custom_call.1} parent=5 // pred_fallthru
        _
    $region6: #{tpu_custom_call.1} parent=1 // loop_footer
      %s44 = sadd.s32 1, %s40
    $region7: #{tpu_custom_call.1} parent=1 // loop_footer_branch
      %39 = sbr.rel target = $region3
    $region8: #{tpu_custom_call.1} parent=1 // loop_exit
      _
    %1279 = vsyncpa [#allocation3], 1
    %s1280 = scalar_lea.sflag [#allocation3], 1
    %1281 = vsyncpa %s1280, 1
    %1282 = vsyncpa [#allocation6], 1
    %s1283 = scalar_lea.sflag [#allocation6], 1
    %1284 = vsyncpa %s1283, 1
    %1285 = vsyncpa [#allocation9], 1
    %s1286 = scalar_lea.sflag [#allocation9], 1
    %1287 = vsyncpa %s1286, 1
    %1288 = vsyncpa [#allocation12], 1
    %s1289 = scalar_lea.sflag [#allocation12], 1
    %1290 = vsyncpa %s1289, 1
    %1291 = vsyncpa [#allocation15], 1
    %1292 = vsyncpa [#allocation4], 1
    %s1293 = scalar_lea.sflag [#allocation4], 1
    %1294 = vsyncpa %s1293, 1
    %1295 = vsyncpa [#allocation19], 1
    %s1296 = scalar_lea.sflag [#allocation19], 1
    %1297 = vsyncpa %s1296, 1

</llo_original>
